<compile_context>
chip_gen: v7x
topology: tpu7x:2x2x1
jax: 0.10.0
libtpu: 0.0.40
codegen_flags: <defaults>
</compile_context>

<pallas_src>
import jax
import jax.numpy as jnp
from jax import lax
from jax.experimental import pallas as pl
from jax.experimental.pallas import tpu as pltpu

EPS = 1e-5


# --------------------------------------------------------------------------
# Fused kernel: dw3x3 -> BN -> ReLU -> 1x1 -> BN -> ReLU -> BN  (stage 1)
#               -> ReLU -> same again (stage 2) -> + identity -> ReLU
# --------------------------------------------------------------------------
def _make_resblock_kernel(H, W, C):
    WC = W * C

    def kernel(x_ref, wdw1_ref, aff1_ref, wbd1_ref,
               wdw2_ref, aff2_ref, wbd2_ref, o_ref, pad_ref):
        # x_ref   : (1, H, W*C)   lane-dense activation (channels fastest)
        # wdw*_ref: (9, W*C)      dw 3x3 taps, BN_a scale + boundary masks folded
        # aff*_ref: (4, W*C)      rows = [bias_a, bias_b, scale_out, bias_out]
        # wbd*_ref: (W*C, W*C)    block-diagonal 1x1 weights, bf16 (BN_b folded)
        # pad_ref : (H+2, W*C)    VMEM scratch; rows 0 / H+1 are the zero halo

        # Zero only the halo rows; the interior is fully overwritten by each
        # stage.  Do NOT guard this on program_id==0: scratch is per-core
        # under dimension_semantics=("parallel",).
        zero_row = jnp.zeros((1, WC), jnp.float32)
        pad_ref[0:1, :] = zero_row
        pad_ref[H + 1:H + 2, :] = zero_row

        def stage(cur, wdw_ref, aff_ref, wbd_ref):
            # cur: (H, W*C).  dw3x3 -> BN_a -> ReLU -> 1x1 -> BN_b -> ReLU -> BN_out
            pad_ref[1:H + 1, :] = cur                     # interior rows
            acc = None
            for kh in range(3):
                xk = pad_ref[kh:kh + H, :]                # rows shifted by kh-1
                # Wrapped-around lanes of the rolls are killed by the zeroed
                # weight lanes (folded at fold time) -> no per-tap selects.
                left = pltpu.roll(xk, shift=C, axis=1)        # x[w-1]
                right = pltpu.roll(xk, shift=WC - C, axis=1)  # x[w+1]
                part = (left * wdw_ref[kh * 3 + 0]
                        + xk * wdw_ref[kh * 3 + 1]
                        + right * wdw_ref[kh * 3 + 2])
                acc = part if acc is None else acc + part     # first-tap init
            # BN_a bias (scale already folded into the taps) + ReLU
            h1 = jnp.maximum(acc + aff_ref[0], 0.0)
            # 1x1 conv over channels: lane-dense block-diagonal bf16 matmul
            # on the MXU with f32 accumulation.
            z2 = jnp.dot(h1.astype(jnp.bfloat16), wbd_ref[...],
                         preferred_element_type=jnp.float32)
            # BN_b bias + ReLU, then the outer BatchNorm (bn1 / bn2)
            h2 = jnp.maximum(z2 + aff_ref[1], 0.0)
            return h2 * aff_ref[2] + aff_ref[3]

        x = x_ref[0]                                               # (H, W*C)
        h = jnp.maximum(stage(x, wdw1_ref, aff1_ref, wbd1_ref), 0.0)  # conv1->bn1->relu
        z = stage(h, wdw2_ref, aff2_ref, wbd2_ref)                    # conv2->bn2
        o_ref[0] = jnp.maximum(z + x, 0.0)        # + identity -> relu (lane-dense store)

    return kernel


# --------------------------------------------------------------------------
# BN folding into lane-dense kernel parameters (plain JAX glue)
# --------------------------------------------------------------------------
def _fold_bn(gamma, beta, mean, var, eps=EPS):
    s = gamma / jnp.sqrt(var + eps)
    return s, beta - s * mean


def _fold_stage(blk, bn_outer, W):
    """Fold one conv3x3_dw block + outer BN into lane-dense kernel params."""
    wdw, bdw, bn_a, wpw, bn_b = (blk["wdw"], blk["bdw"], blk["bn_a"],
                                 blk["wpw"], blk["bn_b"])
    C = wdw.shape[0]
    WC = W * C
    s_a, t_a = _fold_bn(*bn_a)
    s_b, t_b = _fold_bn(*bn_b)
    s_o, t_o = _fold_bn(*bn_outer)

    # Depthwise 3x3: (C,1,3,3) -> (9, C) with row index kh*3+kw; fold BN_a
    # scale; tile over W.
    wdw_kc = jnp.transpose(wdw[:, 0, :, :], (1, 2, 0)).reshape(9, C)
    wdw_t = jnp.tile(wdw_kc * s_a[None, :], (1, W))                   # (9, W*C)

    # Fold the left/right image-boundary masks into the weights: the kw=0 tap
    # must not touch lanes [0:C) and the kw=2 tap must not touch lanes
    # [WC-C:WC) (those are the wrapped-around lanes of the in-kernel rolls).
    kw = jnp.arange(9) % 3
    lane = jnp.arange(WC)
    keep = jnp.where(kw[:, None] == 0, (lane >= C)[None, :],
                     jnp.where(kw[:, None] == 2, (lane < WC - C)[None, :],
                               True))
    wdw_t = jnp.where(keep, wdw_t, 0.0).astype(jnp.float32)

    bias_a = jnp.tile(s_a * bdw + t_a, W)          # dw bias + BN_a bias folded

    # 1x1 conv: (Cout,Cin,1,1) -> (Cin,Cout); fold BN_b scale into columns
    # (in f32), expand to a block-diagonal (W*Cin, W*Cout) matrix, cast to
    # bf16 last for the MXU.
    w_io = jnp.transpose(wpw[:, :, 0, 0], (1, 0)) * s_b[None, :]
    wbd = jnp.kron(jnp.eye(W, dtype=jnp.float32),
                   w_io.astype(jnp.float32)).astype(jnp.bfloat16)

    aff = jnp.stack([bias_a, jnp.tile(t_b, W),
                     jnp.tile(s_o, W), jnp.tile(t_o, W)],
                    axis=0).astype(jnp.float32)                       # (4, W*C)
    return wdw_t, aff, wbd


@jax.jit
def resblock_forward(x_nchw, params):
    """ResBlock forward (stride=1, downsample=None), NCHW in / NCHW out."""
    N, C, H, W = x_nchw.shape
    x = jnp.transpose(x_nchw, (0, 2, 3, 1)).astype(jnp.float32)   # -> NHWC
    x2 = x.reshape(N, H, W * C)     # free trailing-dim merge: lane-dense slab

    wdw1, aff1, wbd1 = _fold_stage(params["conv1"], params["bn1"], W)
    wdw2, aff2, wbd2 = _fold_stage(params["conv2"], params["bn2"], W)

    WC = W * C
    # Derive the scoped-VMEM request from actual block + scratch sizes
    # (double-buffered), instead of hard-coding a value sized for 128 MiB
    # parts; v7x only has 64 MiB physical VMEM.
    block_bytes = (2 * H * WC * 4                            # x block + out block
                   + 2 * (9 * WC * 4 + 4 * WC * 4 + WC * WC * 2))  # weights x2 stages
    vmem_bytes = 2 * block_bytes + (H + 2) * WC * 4 + (1 << 20)
    vmem_bytes = int(min(max(vmem_bytes, 4 * 1024 * 1024), 64 * 1024 * 1024))

    kernel = _make_resblock_kernel(H, W, C)
    grid_spec = pltpu.PrefetchScalarGridSpec(
        num_scalar_prefetch=0,
        grid=(N,),
        in_specs=[
            pl.BlockSpec((1, H, WC), lambda n: (n, 0, 0)),
            pl.BlockSpec((9, WC), lambda n: (0, 0)),
            pl.BlockSpec((4, WC), lambda n: (0, 0)),
            pl.BlockSpec((WC, WC), lambda n: (0, 0)),
            pl.BlockSpec((9, WC), lambda n: (0, 0)),
            pl.BlockSpec((4, WC), lambda n: (0, 0)),
            pl.BlockSpec((WC, WC), lambda n: (0, 0)),
        ],
        out_specs=pl.BlockSpec((1, H, WC), lambda n: (n, 0, 0)),
        scratch_shapes=[pltpu.VMEM((H + 2, WC), jnp.float32)],
    )
    out2 = pl.pallas_call(
        kernel,
        out_shape=jax.ShapeDtypeStruct((N, H, WC), jnp.float32),
        grid_spec=grid_spec,
        compiler_params=pltpu.CompilerParams(
            dimension_semantics=("parallel",),
            vmem_limit_bytes=vmem_bytes,
        ),
    )(x2, wdw1, aff1, wbd1, wdw2, aff2, wbd2)

    y = out2.reshape(N, H, W, C)
    return jnp.transpose(y, (0, 3, 1, 2))      # -> NCHW


# --------------------------------------------------------------------------
# Deterministic parameter init + plain-JAX reference for verification
# --------------------------------------------------------------------------
def _make_bn(key, c):
    k1, k2, k3, k4 = jax.random.split(key, 4)
    gamma = jax.random.uniform(k1, (c,), minval=0.5, maxval=1.5)
    beta = jax.random.uniform(k2, (c,), minval=-0.5, maxval=0.5)
    mean = jax.random.uniform(k3, (c,), minval=-0.5, maxval=0.5)
    var = jax.random.uniform(k4, (c,), minval=0.5, maxval=1.5)
    return (gamma, beta, mean, var)


def _make_conv3x3_dw(key, cin, cout):
    k1, k2, k3, k4, k5 = jax.random.split(key, 5)
    return {
        "wdw": 0.1 * jax.random.normal(k1, (cin, 1, 3, 3)),
        "bdw": 0.1 * jax.random.normal(k2, (cin,)),
        "bn_a": _make_bn(k3, cin),
        "wpw": 0.1 * jax.random.normal(k4, (cout, cin, 1, 1)),
        "bn_b": _make_bn(k5, cout),
    }


def _ref_bn(x, p):
    gamma, beta, mean, var = p
    inv = gamma / jnp.sqrt(var + EPS)
    return x * inv[None, :, None, None] + (beta - inv * mean)[None, :, None, None]


def _ref_conv3x3_dw(x, blk):
    c = x.shape[1]
    y = lax.conv_general_dilated(x, blk["wdw"], (1, 1), ((1, 1), (1, 1)),
                                 feature_group_count=c,
                                 dimension_numbers=("NCHW", "OIHW", "NCHW"))
    y = y + blk["bdw"][None, :, None, None]
    y = jax.nn.relu(_ref_bn(y, blk["bn_a"]))
    y = lax.conv_general_dilated(y, blk["wpw"], (1, 1), ((0, 0), (0, 0)),
                                 dimension_numbers=("NCHW", "OIHW", "NCHW"))
    y = jax.nn.relu(_ref_bn(y, blk["bn_b"]))
    return y


def _ref_resblock(x, params):
    out = _ref_conv3x3_dw(x, params["conv1"])
    out = jax.nn.relu(_ref_bn(out, params["bn1"]))
    out = _ref_conv3x3_dw(out, params["conv2"])
    out = _ref_bn(out, params["bn2"])
    return jax.nn.relu(out + x)


if __name__ == "__main__":
    N, C, H, W = 2, 16, 16, 16     # inplanes == planes, stride=1, no downsample
    key = jax.random.PRNGKey(0)
    kx, k1, k2, k3, k4 = jax.random.split(key, 5)

    x = jax.random.normal(kx, (N, C, H, W), dtype=jnp.float32)
    params = {
        "conv1": _make_conv3x3_dw(k1, C, C),
        "bn1": _make_bn(k2, C),
        "conv2": _make_conv3x3_dw(k3, C, C),
        "bn2": _make_bn(k4, C),
    }

    out = jax.block_until_ready(resblock_forward(x, params))
    ref = jax.block_until_ready(_ref_resblock(x, params))
    assert out.shape == (N, C, H, W)
    err = jnp.max(jnp.abs(out - ref))
    # bf16 MXU operands -> loosened tolerance (was 1e-3 with f32 matmuls).
    assert jnp.allclose(out, ref, atol=2e-2, rtol=2e-2), f"max err {err}"

    print("KERNEL_OK")
</pallas_src>

<mosaic_0001>
module attributes {stable_mosaic.version = 11 : i64} {
  func.func @kernel(%arg0: i32, %arg1: memref<1x16x256xf32, #tpu.memory_space<vmem>>, %arg2: memref<9x256xf32, #tpu.memory_space<vmem>>, %arg3: memref<4x256xf32, #tpu.memory_space<vmem>>, %arg4: memref<256x256xbf16, #tpu.memory_space<vmem>>, %arg5: memref<9x256xf32, #tpu.memory_space<vmem>>, %arg6: memref<4x256xf32, #tpu.memory_space<vmem>>, %arg7: memref<256x256xbf16, #tpu.memory_space<vmem>>, %arg8: memref<1x16x256xf32, #tpu.memory_space<vmem>>, %arg9: memref<18x256xf32, #tpu.memory_space<vmem>>) attributes {dimension_semantics = [#tpu.dimension_semantics<parallel>], iteration_bounds = array<i64: 2>, scalar_prefetch = 0 : i64, scratch_operands = 1 : i64, tpu.core_type = #tpu.core_type<tc>, window_params = [{transform_indices = @transform_0, window_bounds = array<i64: 1, 16, 256>}, {pipeline_mode = #tpu.pipeline_mode<synchronous>, transform_indices = @transform_1, window_bounds = array<i64: 9, 256>}, {pipeline_mode = #tpu.pipeline_mode<synchronous>, transform_indices = @transform_2, window_bounds = array<i64: 4, 256>}, {pipeline_mode = #tpu.pipeline_mode<synchronous>, transform_indices = @transform_3, window_bounds = array<i64: 256, 256>}, {pipeline_mode = #tpu.pipeline_mode<synchronous>, transform_indices = @transform_4, window_bounds = array<i64: 9, 256>}, {pipeline_mode = #tpu.pipeline_mode<synchronous>, transform_indices = @transform_5, window_bounds = array<i64: 4, 256>}, {pipeline_mode = #tpu.pipeline_mode<synchronous>, transform_indices = @transform_6, window_bounds = array<i64: 256, 256>}, {transform_indices = @transform_7, window_bounds = array<i64: 1, 16, 256>}]} {
    %cst = arith.constant 0.000000e+00 : f32
    %0 = vector.broadcast %cst : f32 to vector<1x256xf32>
    %c0 = arith.constant 0 : index
    %c0_0 = arith.constant 0 : index
    %1 = vector.load %arg9[%c0, %c0_0] : memref<18x256xf32, #tpu.memory_space<vmem>>, vector<1x256xf32>
    tpu.vector_store %arg9[%c0, %c0_0], %0 {strides = array<i32>} : memref<18x256xf32, #tpu.memory_space<vmem>>, vector<1x256xf32>,
    %c17 = arith.constant 17 : index
    %c0_1 = arith.constant 0 : index
    %2 = vector.load %arg9[%c17, %c0_1] : memref<18x256xf32, #tpu.memory_space<vmem>>, vector<1x256xf32>
    tpu.vector_store %arg9[%c17, %c0_1], %0 {strides = array<i32>} : memref<18x256xf32, #tpu.memory_space<vmem>>, vector<1x256xf32>,
    %c0_2 = arith.constant 0 : index
    %c0_3 = arith.constant 0 : index
    %c0_4 = arith.constant 0 : index
    %3 = vector.load %arg1[%c0_2, %c0_3, %c0_4] : memref<1x16x256xf32, #tpu.memory_space<vmem>>, vector<1x16x256xf32>
    %4 = vector.shape_cast %3 : vector<1x16x256xf32> to vector<16x256xf32>
    %c1 = arith.constant 1 : index
    %c0_5 = arith.constant 0 : index
    %5 = vector.load %arg9[%c1, %c0_5] : memref<18x256xf32, #tpu.memory_space<vmem>>, vector<16x256xf32>
    tpu.vector_store %arg9[%c1, %c0_5], %4 {strides = array<i32>} : memref<18x256xf32, #tpu.memory_space<vmem>>, vector<16x256xf32>,
    %c0_6 = arith.constant 0 : index
    %c0_7 = arith.constant 0 : index
    %6 = vector.load %arg9[%c0_6, %c0_7] : memref<18x256xf32, #tpu.memory_space<vmem>>, vector<16x256xf32>
    %c16_i32 = arith.constant 16 : i32
    %7 = tpu.dynamic_rotate %6 by %c16_i32 dim 1 : vector<16x256xf32>, i32 -> vector<16x256xf32>
    %c240_i32 = arith.constant 240 : i32
    %8 = tpu.dynamic_rotate %6 by %c240_i32 dim 1 : vector<16x256xf32>, i32 -> vector<16x256xf32>
    %c0_8 = arith.constant 0 : index
    %c0_9 = arith.constant 0 : index
    %9 = vector.load %arg2[%c0_8, %c0_9] : memref<9x256xf32, #tpu.memory_space<vmem>>, vector<1x256xf32>
    %10 = vector.shape_cast %9 : vector<1x256xf32> to vector<256xf32>
    %11 = vector.shape_cast %10 : vector<256xf32> to vector<1x256xf32>
    %12 = vector.broadcast %11 : vector<1x256xf32> to vector<16x256xf32>
    %13 = arith.mulf %7, %12 : vector<16x256xf32>
    %c1_10 = arith.constant 1 : index
    %c0_11 = arith.constant 0 : index
    %14 = vector.load %arg2[%c1_10, %c0_11] : memref<9x256xf32, #tpu.memory_space<vmem>>, vector<1x256xf32>
    %15 = vector.shape_cast %14 : vector<1x256xf32> to vector<256xf32>
    %16 = vector.shape_cast %15 : vector<256xf32> to vector<1x256xf32>
    %17 = vector.broadcast %16 : vector<1x256xf32> to vector<16x256xf32>
    %18 = arith.mulf %6, %17 : vector<16x256xf32>
    %19 = arith.addf %13, %18 : vector<16x256xf32>
    %c2 = arith.constant 2 : index
    %c0_12 = arith.constant 0 : index
    %20 = vector.load %arg2[%c2, %c0_12] : memref<9x256xf32, #tpu.memory_space<vmem>>, vector<1x256xf32>
    %21 = vector.shape_cast %20 : vector<1x256xf32> to vector<256xf32>
    %22 = vector.shape_cast %21 : vector<256xf32> to vector<1x256xf32>
    %23 = vector.broadcast %22 : vector<1x256xf32> to vector<16x256xf32>
    %24 = arith.mulf %8, %23 : vector<16x256xf32>
    %25 = arith.addf %19, %24 : vector<16x256xf32>
    %c1_13 = arith.constant 1 : index
    %c0_14 = arith.constant 0 : index
    %26 = vector.load %arg9[%c1_13, %c0_14] : memref<18x256xf32, #tpu.memory_space<vmem>>, vector<16x256xf32>
    %c16_i32_15 = arith.constant 16 : i32
    %27 = tpu.dynamic_rotate %26 by %c16_i32_15 dim 1 : vector<16x256xf32>, i32 -> vector<16x256xf32>
    %c240_i32_16 = arith.constant 240 : i32
    %28 = tpu.dynamic_rotate %26 by %c240_i32_16 dim 1 : vector<16x256xf32>, i32 -> vector<16x256xf32>
    %c3 = arith.constant 3 : index
    %c0_17 = arith.constant 0 : index
    %29 = vector.load %arg2[%c3, %c0_17] : memref<9x256xf32, #tpu.memory_space<vmem>>, vector<1x256xf32>
    %30 = vector.shape_cast %29 : vector<1x256xf32> to vector<256xf32>
    %31 = vector.shape_cast %30 : vector<256xf32> to vector<1x256xf32>
    %32 = vector.broadcast %31 : vector<1x256xf32> to vector<16x256xf32>
    %33 = arith.mulf %27, %32 : vector<16x256xf32>
    %c4 = arith.constant 4 : index
    %c0_18 = arith.constant 0 : index
    %34 = vector.load %arg2[%c4, %c0_18] : memref<9x256xf32, #tpu.memory_space<vmem>>, vector<1x256xf32>
    %35 = vector.shape_cast %34 : vector<1x256xf32> to vector<256xf32>
    %36 = vector.shape_cast %35 : vector<256xf32> to vector<1x256xf32>
    %37 = vector.broadcast %36 : vector<1x256xf32> to vector<16x256xf32>
    %38 = arith.mulf %26, %37 : vector<16x256xf32>
    %39 = arith.addf %33, %38 : vector<16x256xf32>
    %c5 = arith.constant 5 : index
    %c0_19 = arith.constant 0 : index
    %40 = vector.load %arg2[%c5, %c0_19] : memref<9x256xf32, #tpu.memory_space<vmem>>, vector<1x256xf32>
    %41 = vector.shape_cast %40 : vector<1x256xf32> to vector<256xf32>
    %42 = vector.shape_cast %41 : vector<256xf32> to vector<1x256xf32>
    %43 = vector.broadcast %42 : vector<1x256xf32> to vector<16x256xf32>
    %44 = arith.mulf %28, %43 : vector<16x256xf32>
    %45 = arith.addf %39, %44 : vector<16x256xf32>
    %46 = arith.addf %25, %45 : vector<16x256xf32>
    %c2_20 = arith.constant 2 : index
    %c0_21 = arith.constant 0 : index
    %47 = vector.load %arg9[%c2_20, %c0_21] : memref<18x256xf32, #tpu.memory_space<vmem>>, vector<16x256xf32>
    %c16_i32_22 = arith.constant 16 : i32
    %48 = tpu.dynamic_rotate %47 by %c16_i32_22 dim 1 : vector<16x256xf32>, i32 -> vector<16x256xf32>
    %c240_i32_23 = arith.constant 240 : i32
    %49 = tpu.dynamic_rotate %47 by %c240_i32_23 dim 1 : vector<16x256xf32>, i32 -> vector<16x256xf32>
    %c6 = arith.constant 6 : index
    %c0_24 = arith.constant 0 : index
    %50 = vector.load %arg2[%c6, %c0_24] : memref<9x256xf32, #tpu.memory_space<vmem>>, vector<1x256xf32>
    %51 = vector.shape_cast %50 : vector<1x256xf32> to vector<256xf32>
    %52 = vector.shape_cast %51 : vector<256xf32> to vector<1x256xf32>
    %53 = vector.broadcast %52 : vector<1x256xf32> to vector<16x256xf32>
    %54 = arith.mulf %48, %53 : vector<16x256xf32>
    %c7 = arith.constant 7 : index
    %c0_25 = arith.constant 0 : index
    %55 = vector.load %arg2[%c7, %c0_25] : memref<9x256xf32, #tpu.memory_space<vmem>>, vector<1x256xf32>
    %56 = vector.shape_cast %55 : vector<1x256xf32> to vector<256xf32>
    %57 = vector.shape_cast %56 : vector<256xf32> to vector<1x256xf32>
    %58 = vector.broadcast %57 : vector<1x256xf32> to vector<16x256xf32>
    %59 = arith.mulf %47, %58 : vector<16x256xf32>
    %60 = arith.addf %54, %59 : vector<16x256xf32>
    %c8 = arith.constant 8 : index
    %c0_26 = arith.constant 0 : index
    %61 = vector.load %arg2[%c8, %c0_26] : memref<9x256xf32, #tpu.memory_space<vmem>>, vector<1x256xf32>
    %62 = vector.shape_cast %61 : vector<1x256xf32> to vector<256xf32>
    %63 = vector.shape_cast %62 : vector<256xf32> to vector<1x256xf32>
    %64 = vector.broadcast %63 : vector<1x256xf32> to vector<16x256xf32>
    %65 = arith.mulf %49, %64 : vector<16x256xf32>
    %66 = arith.addf %60, %65 : vector<16x256xf32>
    %67 = arith.addf %46, %66 : vector<16x256xf32>
    %c0_27 = arith.constant 0 : index
    %c0_28 = arith.constant 0 : index
    %68 = vector.load %arg3[%c0_27, %c0_28] : memref<4x256xf32, #tpu.memory_space<vmem>>, vector<1x256xf32>
    %69 = vector.shape_cast %68 : vector<1x256xf32> to vector<256xf32>
    %70 = vector.shape_cast %69 : vector<256xf32> to vector<1x256xf32>
    %71 = vector.broadcast %70 : vector<1x256xf32> to vector<16x256xf32>
    %72 = arith.addf %67, %71 : vector<16x256xf32>
    %cst_29 = arith.constant 0.000000e+00 : f32
    %73 = vector.broadcast %cst_29 : f32 to vector<16x256xf32>
    %74 = arith.maximumf %72, %73 : vector<16x256xf32>
    %75 = arith.truncf %74 : vector<16x256xf32> to vector<16x256xbf16>
    %c0_30 = arith.constant 0 : index
    %c0_31 = arith.constant 0 : index
    %76 = vector.load %arg4[%c0_30, %c0_31] : memref<256x256xbf16, #tpu.memory_space<vmem>>, vector<256x256xbf16>
    %cst_32 = arith.constant dense<0.000000e+00> : vector<16x256xf32>
    %77 = tpu.matmul %75, %76, %cst_32 {dimension_numbers = #tpu.dot_dimension_numbers<[1], [0], [0], [1], [0, 0, 1, 1], [], []>} : vector<16x256xbf16>, vector<256x256xbf16>, vector<16x256xf32> -> vector<16x256xf32>
    %c1_33 = arith.constant 1 : index
    %c0_34 = arith.constant 0 : index
    %78 = vector.load %arg3[%c1_33, %c0_34] : memref<4x256xf32, #tpu.memory_space<vmem>>, vector<1x256xf32>
    %79 = vector.shape_cast %78 : vector<1x256xf32> to vector<256xf32>
    %80 = vector.shape_cast %79 : vector<256xf32> to vector<1x256xf32>
    %81 = vector.broadcast %80 : vector<1x256xf32> to vector<16x256xf32>
    %82 = arith.addf %77, %81 : vector<16x256xf32>
    %cst_35 = arith.constant 0.000000e+00 : f32
    %83 = vector.broadcast %cst_35 : f32 to vector<16x256xf32>
    %84 = arith.maximumf %82, %83 : vector<16x256xf32>
    %c2_36 = arith.constant 2 : index
    %c0_37 = arith.constant 0 : index
    %85 = vector.load %arg3[%c2_36, %c0_37] : memref<4x256xf32, #tpu.memory_space<vmem>>, vector<1x256xf32>
    %86 = vector.shape_cast %85 : vector<1x256xf32> to vector<256xf32>
    %87 = vector.shape_cast %86 : vector<256xf32> to vector<1x256xf32>
    %88 = vector.broadcast %87 : vector<1x256xf32> to vector<16x256xf32>
    %89 = arith.mulf %84, %88 : vector<16x256xf32>
    %c3_38 = arith.constant 3 : index
    %c0_39 = arith.constant 0 : index
    %90 = vector.load %arg3[%c3_38, %c0_39] : memref<4x256xf32, #tpu.memory_space<vmem>>, vector<1x256xf32>
    %91 = vector.shape_cast %90 : vector<1x256xf32> to vector<256xf32>
    %92 = vector.shape_cast %91 : vector<256xf32> to vector<1x256xf32>
    %93 = vector.broadcast %92 : vector<1x256xf32> to vector<16x256xf32>
    %94 = arith.addf %89, %93 : vector<16x256xf32>
    %cst_40 = arith.constant 0.000000e+00 : f32
    %95 = vector.broadcast %cst_40 : f32 to vector<16x256xf32>
    %96 = arith.maximumf %94, %95 : vector<16x256xf32>
    %c1_41 = arith.constant 1 : index
    %c0_42 = arith.constant 0 : index
    %97 = vector.load %arg9[%c1_41, %c0_42] : memref<18x256xf32, #tpu.memory_space<vmem>>, vector<16x256xf32>
    tpu.vector_store %arg9[%c1_41, %c0_42], %96 {strides = array<i32>} : memref<18x256xf32, #tpu.memory_space<vmem>>, vector<16x256xf32>,
    %c0_43 = arith.constant 0 : index
    %c0_44 = arith.constant 0 : index
    %98 = vector.load %arg9[%c0_43, %c0_44] : memref<18x256xf32, #tpu.memory_space<vmem>>, vector<16x256xf32>
    %c16_i32_45 = arith.constant 16 : i32
    %99 = tpu.dynamic_rotate %98 by %c16_i32_45 dim 1 : vector<16x256xf32>, i32 -> vector<16x256xf32>
    %c240_i32_46 = arith.constant 240 : i32
    %100 = tpu.dynamic_rotate %98 by %c240_i32_46 dim 1 : vector<16x256xf32>, i32 -> vector<16x256xf32>
    %c0_47 = arith.constant 0 : index
    %c0_48 = arith.constant 0 : index
    %101 = vector.load %arg5[%c0_47, %c0_48] : memref<9x256xf32, #tpu.memory_space<vmem>>, vector<1x256xf32>
    %102 = vector.shape_cast %101 : vector<1x256xf32> to vector<256xf32>
    %103 = vector.shape_cast %102 : vector<256xf32> to vector<1x256xf32>
    %104 = vector.broadcast %103 : vector<1x256xf32> to vector<16x256xf32>
    %105 = arith.mulf %99, %104 : vector<16x256xf32>
    %c1_49 = arith.constant 1 : index
    %c0_50 = arith.constant 0 : index
    %106 = vector.load %arg5[%c1_49, %c0_50] : memref<9x256xf32, #tpu.memory_space<vmem>>, vector<1x256xf32>
    %107 = vector.shape_cast %106 : vector<1x256xf32> to vector<256xf32>
    %108 = vector.shape_cast %107 : vector<256xf32> to vector<1x256xf32>
    %109 = vector.broadcast %108 : vector<1x256xf32> to vector<16x256xf32>
    %110 = arith.mulf %98, %109 : vector<16x256xf32>
    %111 = arith.addf %105, %110 : vector<16x256xf32>
    %c2_51 = arith.constant 2 : index
    %c0_52 = arith.constant 0 : index
    %112 = vector.load %arg5[%c2_51, %c0_52] : memref<9x256xf32, #tpu.memory_space<vmem>>, vector<1x256xf32>
    %113 = vector.shape_cast %112 : vector<1x256xf32> to vector<256xf32>
    %114 = vector.shape_cast %113 : vector<256xf32> to vector<1x256xf32>
    %115 = vector.broadcast %114 : vector<1x256xf32> to vector<16x256xf32>
    %116 = arith.mulf %100, %115 : vector<16x256xf32>
    %117 = arith.addf %111, %116 : vector<16x256xf32>
    %c1_53 = arith.constant 1 : index
    %c0_54 = arith.constant 0 : index
    %118 = vector.load %arg9[%c1_53, %c0_54] : memref<18x256xf32, #tpu.memory_space<vmem>>, vector<16x256xf32>
    %c16_i32_55 = arith.constant 16 : i32
    %119 = tpu.dynamic_rotate %118 by %c16_i32_55 dim 1 : vector<16x256xf32>, i32 -> vector<16x256xf32>
    %c240_i32_56 = arith.constant 240 : i32
    %120 = tpu.dynamic_rotate %118 by %c240_i32_56 dim 1 : vector<16x256xf32>, i32 -> vector<16x256xf32>
    %c3_57 = arith.constant 3 : index
    %c0_58 = arith.constant 0 : index
    %121 = vector.load %arg5[%c3_57, %c0_58] : memref<9x256xf32, #tpu.memory_space<vmem>>, vector<1x256xf32>
    %122 = vector.shape_cast %121 : vector<1x256xf32> to vector<256xf32>
    %123 = vector.shape_cast %122 : vector<256xf32> to vector<1x256xf32>
    %124 = vector.broadcast %123 : vector<1x256xf32> to vector<16x256xf32>
    %125 = arith.mulf %119, %124 : vector<16x256xf32>
    %c4_59 = arith.constant 4 : index
    %c0_60 = arith.constant 0 : index
    %126 = vector.load %arg5[%c4_59, %c0_60] : memref<9x256xf32, #tpu.memory_space<vmem>>, vector<1x256xf32>
    %127 = vector.shape_cast %126 : vector<1x256xf32> to vector<256xf32>
    %128 = vector.shape_cast %127 : vector<256xf32> to vector<1x256xf32>
    %129 = vector.broadcast %128 : vector<1x256xf32> to vector<16x256xf32>
    %130 = arith.mulf %118, %129 : vector<16x256xf32>
    %131 = arith.addf %125, %130 : vector<16x256xf32>
    %c5_61 = arith.constant 5 : index
    %c0_62 = arith.constant 0 : index
    %132 = vector.load %arg5[%c5_61, %c0_62] : memref<9x256xf32, #tpu.memory_space<vmem>>, vector<1x256xf32>
    %133 = vector.shape_cast %132 : vector<1x256xf32> to vector<256xf32>
    %134 = vector.shape_cast %133 : vector<256xf32> to vector<1x256xf32>
    %135 = vector.broadcast %134 : vector<1x256xf32> to vector<16x256xf32>
    %136 = arith.mulf %120, %135 : vector<16x256xf32>
    %137 = arith.addf %131, %136 : vector<16x256xf32>
    %138 = arith.addf %117, %137 : vector<16x256xf32>
    %c2_63 = arith.constant 2 : index
    %c0_64 = arith.constant 0 : index
    %139 = vector.load %arg9[%c2_63, %c0_64] : memref<18x256xf32, #tpu.memory_space<vmem>>, vector<16x256xf32>
    %c16_i32_65 = arith.constant 16 : i32
    %140 = tpu.dynamic_rotate %139 by %c16_i32_65 dim 1 : vector<16x256xf32>, i32 -> vector<16x256xf32>
    %c240_i32_66 = arith.constant 240 : i32
    %141 = tpu.dynamic_rotate %139 by %c240_i32_66 dim 1 : vector<16x256xf32>, i32 -> vector<16x256xf32>
    %c6_67 = arith.constant 6 : index
    %c0_68 = arith.constant 0 : index
    %142 = vector.load %arg5[%c6_67, %c0_68] : memref<9x256xf32, #tpu.memory_space<vmem>>, vector<1x256xf32>
    %143 = vector.shape_cast %142 : vector<1x256xf32> to vector<256xf32>
    %144 = vector.shape_cast %143 : vector<256xf32> to vector<1x256xf32>
    %145 = vector.broadcast %144 : vector<1x256xf32> to vector<16x256xf32>
    %146 = arith.mulf %140, %145 : vector<16x256xf32>
    %c7_69 = arith.constant 7 : index
    %c0_70 = arith.constant 0 : index
    %147 = vector.load %arg5[%c7_69, %c0_70] : memref<9x256xf32, #tpu.memory_space<vmem>>, vector<1x256xf32>
    %148 = vector.shape_cast %147 : vector<1x256xf32> to vector<256xf32>
    %149 = vector.shape_cast %148 : vector<256xf32> to vector<1x256xf32>
    %150 = vector.broadcast %149 : vector<1x256xf32> to vector<16x256xf32>
    %151 = arith.mulf %139, %150 : vector<16x256xf32>
    %152 = arith.addf %146, %151 : vector<16x256xf32>
    %c8_71 = arith.constant 8 : index
    %c0_72 = arith.constant 0 : index
    %153 = vector.load %arg5[%c8_71, %c0_72] : memref<9x256xf32, #tpu.memory_space<vmem>>, vector<1x256xf32>
    %154 = vector.shape_cast %153 : vector<1x256xf32> to vector<256xf32>
    %155 = vector.shape_cast %154 : vector<256xf32> to vector<1x256xf32>
    %156 = vector.broadcast %155 : vector<1x256xf32> to vector<16x256xf32>
    %157 = arith.mulf %141, %156 : vector<16x256xf32>
    %158 = arith.addf %152, %157 : vector<16x256xf32>
    %159 = arith.addf %138, %158 : vector<16x256xf32>
    %c0_73 = arith.constant 0 : index
    %c0_74 = arith.constant 0 : index
    %160 = vector.load %arg6[%c0_73, %c0_74] : memref<4x256xf32, #tpu.memory_space<vmem>>, vector<1x256xf32>
    %161 = vector.shape_cast %160 : vector<1x256xf32> to vector<256xf32>
    %162 = vector.shape_cast %161 : vector<256xf32> to vector<1x256xf32>
    %163 = vector.broadcast %162 : vector<1x256xf32> to vector<16x256xf32>
    %164 = arith.addf %159, %163 : vector<16x256xf32>
    %cst_75 = arith.constant 0.000000e+00 : f32
    %165 = vector.broadcast %cst_75 : f32 to vector<16x256xf32>
    %166 = arith.maximumf %164, %165 : vector<16x256xf32>
    %167 = arith.truncf %166 : vector<16x256xf32> to vector<16x256xbf16>
    %c0_76 = arith.constant 0 : index
    %c0_77 = arith.constant 0 : index
    %168 = vector.load %arg7[%c0_76, %c0_77] : memref<256x256xbf16, #tpu.memory_space<vmem>>, vector<256x256xbf16>
    %cst_78 = arith.constant dense<0.000000e+00> : vector<16x256xf32>
    %169 = tpu.matmul %167, %168, %cst_78 {dimension_numbers = #tpu.dot_dimension_numbers<[1], [0], [0], [1], [0, 0, 1, 1], [], []>} : vector<16x256xbf16>, vector<256x256xbf16>, vector<16x256xf32> -> vector<16x256xf32>
    %c1_79 = arith.constant 1 : index
    %c0_80 = arith.constant 0 : index
    %170 = vector.load %arg6[%c1_79, %c0_80] : memref<4x256xf32, #tpu.memory_space<vmem>>, vector<1x256xf32>
    %171 = vector.shape_cast %170 : vector<1x256xf32> to vector<256xf32>
    %172 = vector.shape_cast %171 : vector<256xf32> to vector<1x256xf32>
    %173 = vector.broadcast %172 : vector<1x256xf32> to vector<16x256xf32>
    %174 = arith.addf %169, %173 : vector<16x256xf32>
    %cst_81 = arith.constant 0.000000e+00 : f32
    %175 = vector.broadcast %cst_81 : f32 to vector<16x256xf32>
    %176 = arith.maximumf %174, %175 : vector<16x256xf32>
    %c2_82 = arith.constant 2 : index
    %c0_83 = arith.constant 0 : index
    %177 = vector.load %arg6[%c2_82, %c0_83] : memref<4x256xf32, #tpu.memory_space<vmem>>, vector<1x256xf32>
    %178 = vector.shape_cast %177 : vector<1x256xf32> to vector<256xf32>
    %179 = vector.shape_cast %178 : vector<256xf32> to vector<1x256xf32>
    %180 = vector.broadcast %179 : vector<1x256xf32> to vector<16x256xf32>
    %181 = arith.mulf %176, %180 : vector<16x256xf32>
    %c3_84 = arith.constant 3 : index
    %c0_85 = arith.constant 0 : index
    %182 = vector.load %arg6[%c3_84, %c0_85] : memref<4x256xf32, #tpu.memory_space<vmem>>, vector<1x256xf32>
    %183 = vector.shape_cast %182 : vector<1x256xf32> to vector<256xf32>
    %184 = vector.shape_cast %183 : vector<256xf32> to vector<1x256xf32>
    %185 = vector.broadcast %184 : vector<1x256xf32> to vector<16x256xf32>
    %186 = arith.addf %181, %185 : vector<16x256xf32>
    %187 = arith.addf %186, %4 : vector<16x256xf32>
    %cst_86 = arith.constant 0.000000e+00 : f32
    %188 = vector.broadcast %cst_86 : f32 to vector<16x256xf32>
    %189 = arith.maximumf %187, %188 : vector<16x256xf32>
    %c0_87 = arith.constant 0 : index
    %c0_88 = arith.constant 0 : index
    %c0_89 = arith.constant 0 : index
    %190 = vector.load %arg8[%c0_87, %c0_88, %c0_89] : memref<1x16x256xf32, #tpu.memory_space<vmem>>, vector<1x16x256xf32>
    %191 = vector.shape_cast %190 : vector<1x16x256xf32> to vector<16x256xf32>
    %192 = vector.shape_cast %189 : vector<16x256xf32> to vector<1x16x256xf32>
    tpu.vector_store %arg8[%c0_87, %c0_88, %c0_89], %192 {strides = array<i32>} : memref<1x16x256xf32, #tpu.memory_space<vmem>>, vector<1x16x256xf32>,
    return
  }
  func.func @transform_0(%arg0: i32) -> (i32, i32, i32) {
    %c0_i32 = arith.constant 0 : i32
    %c0_i32_0 = arith.constant 0 : i32
    %c0_i32_1 = arith.constant 0 : i32
    return %arg0, %c0_i32, %c0_i32_0 : i32, i32, i32
  }
  func.func @transform_1(%arg0: i32) -> (i32, i32) {
    %c0_i32 = arith.constant 0 : i32
    %c0_i32_0 = arith.constant 0 : i32
    %c0_i32_1 = arith.constant 0 : i32
    return %c0_i32, %c0_i32_0 : i32, i32
  }
  func.func @transform_2(%arg0: i32) -> (i32, i32) {
    %c0_i32 = arith.constant 0 : i32
    %c0_i32_0 = arith.constant 0 : i32
    %c0_i32_1 = arith.constant 0 : i32
    return %c0_i32, %c0_i32_0 : i32, i32
  }
  func.func @transform_3(%arg0: i32) -> (i32, i32) {
    %c0_i32 = arith.constant 0 : i32
    %c0_i32_0 = arith.constant 0 : i32
    %c0_i32_1 = arith.constant 0 : i32
    return %c0_i32, %c0_i32_0 : i32, i32
  }
  func.func @transform_4(%arg0: i32) -> (i32, i32) {
    %c0_i32 = arith.constant 0 : i32
    %c0_i32_0 = arith.constant 0 : i32
    %c0_i32_1 = arith.constant 0 : i32
    return %c0_i32, %c0_i32_0 : i32, i32
  }
  func.func @transform_5(%arg0: i32) -> (i32, i32) {
    %c0_i32 = arith.constant 0 : i32
    %c0_i32_0 = arith.constant 0 : i32
    %c0_i32_1 = arith.constant 0 : i32
    return %c0_i32, %c0_i32_0 : i32, i32
  }
  func.func @transform_6(%arg0: i32) -> (i32, i32) {
    %c0_i32 = arith.constant 0 : i32
    %c0_i32_0 = arith.constant 0 : i32
    %c0_i32_1 = arith.constant 0 : i32
    return %c0_i32, %c0_i32_0 : i32, i32
  }
  func.func @transform_7(%arg0: i32) -> (i32, i32, i32) {
    %c0_i32 = arith.constant 0 : i32
    %c0_i32_0 = arith.constant 0 : i32
    %c0_i32_1 = arith.constant 0 : i32
    return %arg0, %c0_i32, %c0_i32_0 : i32, i32, i32
  }
}

</mosaic_0001>

<llo_original>
// kernel: tile.71
$region0: #{tile.71}
  %s0 = inlined_call_operand.vmem [shape: f32[16,16], index: 0, kind: input, shape index: {}]
  %s1 = inlined_call_operand.vmem [shape: f32[1,256], index: 1, kind: output, shape index: {}]
  $region1: #{tile.71} parent=0
    #allocation0 [shape = 'u8[8192]{0}', space=vmem, size = 0x2000, scoped, tag = 'scoped mem for output reshape']
    %s2 = smov 3
    %v3 = vld [vmem:[%s0] ss:$8 sm:%s2]
    %vm4 = vcmask 130048
    %5 = vst.msk [vmem:[#allocation0] ss:$8 sm:$0x3] %vm4, %v3
    %s6 = scalar_lea.vmem %s0, 7
    %s7 = smov 3
    %v8 = vld [vmem:[%s6] ss:$8 sm:%s7]
    %9 = vrot.lane.b32.xlu0 %v8, 112
    %v10 = vpop.permute.xlu0 %9
    %vm11 = vcmask 1048448
    %12 = vst.msk [vmem:[#allocation0] ss:$8 sm:$0x3] %vm11, %v10
    %s13 = scalar_lea.vmem %s0, 6
    %s14 = smov 3
    %v15 = vld [vmem:[%s13] ss:$8 sm:%s14]
    %16 = vrot.lane.b32.xlu0 %v15, 96
    %v17 = vpop.permute.xlu0 %16
    %vm18 = vcmask 917248
    %19 = vst.msk [vmem:[#allocation0] ss:$8 sm:$0x3] %vm18, %v17
    %s20 = scalar_lea.vmem %s0, 5
    %s21 = smov 3
    %v22 = vld [vmem:[%s20] ss:$8 sm:%s21]
    %23 = vrot.lane.b32.xlu0 %v22, 80
    %v24 = vpop.permute.xlu0 %23
    %vm25 = vcmask 786048
    %26 = vst.msk [vmem:[#allocation0] ss:$8 sm:$0x3] %vm25, %v24
    %s27 = scalar_lea.vmem %s0, 4
    %s28 = smov 3
    %v29 = vld [vmem:[%s27] ss:$8 sm:%s28]
    %30 = vrot.lane.b32.xlu0 %v29, 64
    %v31 = vpop.permute.xlu0 %30
    %vm32 = vcmask 654848
    %33 = vst.msk [vmem:[#allocation0] ss:$8 sm:$0x3] %vm32, %v31
    %s34 = scalar_lea.vmem %s0, 3
    %s35 = smov 3
    %v36 = vld [vmem:[%s34] ss:$8 sm:%s35]
    %37 = vrot.lane.b32.xlu0 %v36, 48
    %v38 = vpop.permute.xlu0 %37
    %vm39 = vcmask 523648
    %40 = vst.msk [vmem:[#allocation0] ss:$8 sm:$0x3] %vm39, %v38
    %s41 = scalar_lea.vmem %s0, 2
    %s42 = smov 3
    %v43 = vld [vmem:[%s41] ss:$8 sm:%s42]
    %44 = vrot.lane.b32.xlu0 %v43, 32
    %v45 = vpop.permute.xlu0 %44
    %vm46 = vcmask 392448
    %47 = vst.msk [vmem:[#allocation0] ss:$8 sm:$0x3] %vm46, %v45
    %s48 = scalar_lea.vmem %s0, 1
    %s49 = smov 3
    %v50 = vld [vmem:[%s48] ss:$8 sm:%s49]
    %51 = vrot.lane.b32.xlu0 %v50, 16
    %v52 = vpop.permute.xlu0 %51
    %vm53 = vcmask 261248
    %54 = vst.msk [vmem:[#allocation0] ss:$8 sm:$0x3] %vm53, %v52
    %s56 = sshllo.u32 0, 1
    %v58 = vld [vmem:[#allocation0] sm:%s56]
    %s59 = sshllo.u32 0, 1
    %60 = vst [vmem:[%s1] sm:%s59] %v58
    %s61 = scalar_lea.vmem [#allocation0], 8
    %v62 = vld [vmem:[%s61] sm:%s56]
    %s63 = sshllo.u32 0, 1
    %s64 = scalar_lea.vmem %s1, 1
    %65 = vst [vmem:[%s64] sm:%s63] %v62

// kernel: tile.58
$region0: #{tile.58}
  #allocation0 [shape = 's32[1]{0}', space=sflag, size = 0x4, scoped, tag = 'scoped memory for tile.58']
  %s0 = inlined_call_operand.vmem [shape: f32[16], index: 0, kind: input, shape index: {}]
  %s1 = inlined_call_operand.vmem [shape: f32[16,16], index: 1, kind: output, shape index: {}]
  // Predicated region
  $region2: #{tile.58} parent=0 // pred_check
    _
  $region3: #{tile.58} parent=0 // pred_check_branch
    %3 = sbr.rel (0) target = $region5
  $region4: #{tile.58} parent=0 // pred_region
    _
  $region5: #{tile.58} parent=0 // pred_fallthru
    _
  %v4 = vld [vmem:[%s0] ss:$0 sm:$0xff]
  %5 = vst [vmem:[%s1] sm:$0xff] %v4
  %s6 = scalar_lea.vmem %s1, 8
  %7 = vst [vmem:[%s6] sm:$0xff] %v4

// kernel: tile.54
$region0: #{tile.54}
  %s0 = inlined_call_operand.vmem [shape: f32[9,16,16], index: 0, kind: input, shape index: {}]
  %s1 = inlined_call_operand.vmem [shape: f32[9,256], index: 1, kind: output, shape index: {}]
  %v2 = vld [vmem:[%s0] ss:$8 sm:$0xf]
  %v3 = vld [vmem:[%s0] ss:$8 sm:$0xf0]
  %vm4 = vcmask 1047556
  %v5 = vsel %vm4, %v3, %v2
  %vm6 = vcmask 130048
  %7 = vst.msk [vmem:[%s1] ss:$8 sm:$0x3] %vm6, %v5
  %s8 = scalar_lea.vmem %s1, 4294967281
  %9 = vst.msk [vmem:[%s8] ss:$8 sm:$0xc] %vm6, %v5
  %s10 = scalar_lea.vmem %s1, 4294967266
  %11 = vst.msk [vmem:[%s10] ss:$8 sm:$0x30] %vm6, %v5
  %s12 = scalar_lea.vmem %s1, 4294967251
  %13 = vst.msk [vmem:[%s12] ss:$8 sm:$0xc0] %vm6, %v5
  %s14 = scalar_lea.vmem %s0, 64
  %v15 = vld [vmem:[%s14] ss:$8 sm:$0xf]
  %s16 = scalar_lea.vmem %s0, 64
  %v17 = vld [vmem:[%s16] ss:$8 sm:$0xf0]
  %vm18 = vcmask 1047556
  %v19 = vsel %vm18, %v17, %v15
  %vm20 = vcmask 130048
  %s21 = scalar_lea.vmem %s1, 4
  %22 = vst.msk [vmem:[%s21] ss:$8 sm:$0x3] %vm20, %v19
  %s23 = scalar_lea.vmem %s1, 4294967285
  %24 = vst.msk [vmem:[%s23] ss:$8 sm:$0xc] %vm20, %v19
  %s25 = scalar_lea.vmem %s1, 4294967270
  %26 = vst.msk [vmem:[%s25] ss:$8 sm:$0x30] %vm20, %v19
  %s27 = scalar_lea.vmem %s1, 4294967255
  %28 = vst.msk [vmem:[%s27] ss:$8 sm:$0xc0] %vm20, %v19
  %s29 = scalar_lea.vmem %s0, 128
  %s30 = smov 3
  %v31 = vld [vmem:[%s29] ss:$8 sm:%s30]
  %vm32 = vcmask 130048
  %s33 = scalar_lea.vmem %s1, 16
  %34 = vst.msk [vmem:[%s33] ss:$8 sm:$0x3] %vm32, %v31
  %s35 = scalar_lea.vmem %s0, 7
  %s36 = smov 3
  %v37 = vld [vmem:[%s35] ss:$16 sm:%s36]
  %s38 = scalar_lea.vmem %s0, 7
  %s39 = smov 12
  %v40 = vld [vmem:[%s38] ss:$16 sm:%s39]
  %vm41 = vcmask 1043458
  %v42 = vsel %vm41, %v40, %v37
  %s43 = scalar_lea.vmem %s0, 7
  %s44 = smov 48
  %v45 = vld [vmem:[%s43] ss:$16 sm:%s44]
  %vm46 = vcmask 1045508
  %v47 = vsel %vm46, %v45, %v42
  %s48 = scalar_lea.vmem %s0, 7
  %s49 = smov 192
  %v50 = vld [vmem:[%s48] ss:$16 sm:%s49]
  %vm51 = vcmask 1047558
  %v52 = vsel %vm51, %v50, %v47
  %53 = vrot.lane.b32.xlu0 %v52, 112
  %v54 = vpop.permute.xlu0 %53
  %vm55 = vcmask 1048448
  %56 = vst.msk [vmem:[%s1] sm:$0xff] %vm55, %v54
  %s57 = scalar_lea.vmem %s0, 15
  %s58 = smov 3
  %v59 = vld [vmem:[%s57] ss:$16 sm:%s58]
  %s60 = scalar_lea.vmem %s0, 15
  %s61 = smov 12
  %v62 = vld [vmem:[%s60] ss:$16 sm:%s61]
  %vm63 = vcmask 1043458
  %v64 = vsel %vm63, %v62, %v59
  %s65 = scalar_lea.vmem %s0, 15
  %s66 = smov 48
  %v67 = vld [vmem:[%s65] ss:$16 sm:%s66]
  %vm68 = vcmask 1045508
  %v69 = vsel %vm68, %v67, %v64
  %s70 = scalar_lea.vmem %s0, 15
  %s71 = smov 192
  %v72 = vld [vmem:[%s70] ss:$16 sm:%s71]
  %vm73 = vcmask 1047558
  %v74 = vsel %vm73, %v72, %v69
  %75 = vrot.lane.b32.xlu0 %v74, 112
  %v76 = vpop.permute.xlu0 %75
  %vm77 = vcmask 1048448
  %s78 = scalar_lea.vmem %s1, 8
  %79 = vst.msk [vmem:[%s78] sm:$0xff] %vm77, %v76
  %s80 = scalar_lea.vmem %s0, 135
  %s81 = smov 3
  %v82 = vld [vmem:[%s80] ss:$8 sm:%s81]
  %83 = vrot.lane.b32.xlu0 %v82, 112
  %v84 = vpop.permute.xlu0 %83
  %vm85 = vcmask 1048448
  %s86 = scalar_lea.vmem %s1, 16
  %87 = vst.msk [vmem:[%s86] ss:$8 sm:$0x3] %vm85, %v84
  %s88 = scalar_lea.vmem %s0, 6
  %s89 = smov 3
  %v90 = vld [vmem:[%s88] ss:$16 sm:%s89]
  %s91 = scalar_lea.vmem %s0, 6
  %s92 = smov 12
  %v93 = vld [vmem:[%s91] ss:$16 sm:%s92]
  %vm94 = vcmask 1043458
  %v95 = vsel %vm94, %v93, %v90
  %s96 = scalar_lea.vmem %s0, 6
  %s97 = smov 48
  %v98 = vld [vmem:[%s96] ss:$16 sm:%s97]
  %vm99 = vcmask 1045508
  %v100 = vsel %vm99, %v98, %v95
  %s101 = scalar_lea.vmem %s0, 6
  %s102 = smov 192
  %v103 = vld [vmem:[%s101] ss:$16 sm:%s102]
  %vm104 = vcmask 1047558
  %v105 = vsel %vm104, %v103, %v100
  %106 = vrot.lane.b32.xlu0 %v105, 96
  %v107 = vpop.permute.xlu0 %106
  %vm108 = vcmask 917248
  %109 = vst.msk [vmem:[%s1] sm:$0xff] %vm108, %v107
  %s110 = scalar_lea.vmem %s0, 14
  %s111 = smov 3
  %v112 = vld [vmem:[%s110] ss:$16 sm:%s111]
  %s113 = scalar_lea.vmem %s0, 14
  %s114 = smov 12
  %v115 = vld [vmem:[%s113] ss:$16 sm:%s114]
  %vm116 = vcmask 1043458
  %v117 = vsel %vm116, %v115, %v112
  %s118 = scalar_lea.vmem %s0, 14
  %s119 = smov 48
  %v120 = vld [vmem:[%s118] ss:$16 sm:%s119]
  %vm121 = vcmask 1045508
  %v122 = vsel %vm121, %v120, %v117
  %s123 = scalar_lea.vmem %s0, 14
  %s124 = smov 192
  %v125 = vld [vmem:[%s123] ss:$16 sm:%s124]
  %vm126 = vcmask 1047558
  %v127 = vsel %vm126, %v125, %v122
  %128 = vrot.lane.b32.xlu0 %v127, 96
  %v129 = vpop.permute.xlu0 %128
  %vm130 = vcmask 917248
  %s131 = scalar_lea.vmem %s1, 8
  %132 = vst.msk [vmem:[%s131] sm:$0xff] %vm130, %v129
  %s133 = scalar_lea.vmem %s0, 134
  %s134 = smov 3
  %v135 = vld [vmem:[%s133] ss:$8 sm:%s134]
  %136 = vrot.lane.b32.xlu0 %v135, 96
  %v137 = vpop.permute.xlu0 %136
  %vm138 = vcmask 917248
  %s139 = scalar_lea.vmem %s1, 16
  %140 = vst.msk [vmem:[%s139] ss:$8 sm:$0x3] %vm138, %v137
  %s141 = scalar_lea.vmem %s0, 5
  %s142 = smov 3
  %v143 = vld [vmem:[%s141] ss:$16 sm:%s142]
  %s144 = scalar_lea.vmem %s0, 5
  %s145 = smov 12
  %v146 = vld [vmem:[%s144] ss:$16 sm:%s145]
  %vm147 = vcmask 1043458
  %v148 = vsel %vm147, %v146, %v143
  %s149 = scalar_lea.vmem %s0, 5
  %s150 = smov 48
  %v151 = vld [vmem:[%s149] ss:$16 sm:%s150]
  %vm152 = vcmask 1045508
  %v153 = vsel %vm152, %v151, %v148
  %s154 = scalar_lea.vmem %s0, 5
  %s155 = smov 192
  %v156 = vld [vmem:[%s154] ss:$16 sm:%s155]
  %vm157 = vcmask 1047558
  %v158 = vsel %vm157, %v156, %v153
  %159 = vrot.lane.b32.xlu0 %v158, 80
  %v160 = vpop.permute.xlu0 %159
  %vm161 = vcmask 786048
  %162 = vst.msk [vmem:[%s1] sm:$0xff] %vm161, %v160
  %s163 = scalar_lea.vmem %s0, 13
  %s164 = smov 3
  %v165 = vld [vmem:[%s163] ss:$16 sm:%s164]
  %s166 = scalar_lea.vmem %s0, 13
  %s167 = smov 12
  %v168 = vld [vmem:[%s166] ss:$16 sm:%s167]
  %vm169 = vcmask 1043458
  %v170 = vsel %vm169, %v168, %v165
  %s171 = scalar_lea.vmem %s0, 13
  %s172 = smov 48
  %v173 = vld [vmem:[%s171] ss:$16 sm:%s172]
  %vm174 = vcmask 1045508
  %v175 = vsel %vm174, %v173, %v170
  %s176 = scalar_lea.vmem %s0, 13
  %s177 = smov 192
  %v178 = vld [vmem:[%s176] ss:$16 sm:%s177]
  %vm179 = vcmask 1047558
  %v180 = vsel %vm179, %v178, %v175
  %181 = vrot.lane.b32.xlu0 %v180, 80
  %v182 = vpop.permute.xlu0 %181
  %vm183 = vcmask 786048
  %s184 = scalar_lea.vmem %s1, 8
  %185 = vst.msk [vmem:[%s184] sm:$0xff] %vm183, %v182
  %s186 = scalar_lea.vmem %s0, 133
  %s187 = smov 3
  %v188 = vld [vmem:[%s186] ss:$8 sm:%s187]
  %189 = vrot.lane.b32.xlu0 %v188, 80
  %v190 = vpop.permute.xlu0 %189
  %vm191 = vcmask 786048
  %s192 = scalar_lea.vmem %s1, 16
  %193 = vst.msk [vmem:[%s192] ss:$8 sm:$0x3] %vm191, %v190
  %s194 = scalar_lea.vmem %s0, 4
  %s195 = smov 3
  %v196 = vld [vmem:[%s194] ss:$16 sm:%s195]
  %s197 = scalar_lea.vmem %s0, 4
  %s198 = smov 12
  %v199 = vld [vmem:[%s197] ss:$16 sm:%s198]
  %vm200 = vcmask 1043458
  %v201 = vsel %vm200, %v199, %v196
  %s202 = scalar_lea.vmem %s0, 4
  %s203 = smov 48
  %v204 = vld [vmem:[%s202] ss:$16 sm:%s203]
  %vm205 = vcmask 1045508
  %v206 = vsel %vm205, %v204, %v201
  %s207 = scalar_lea.vmem %s0, 4
  %s208 = smov 192
  %v209 = vld [vmem:[%s207] ss:$16 sm:%s208]
  %vm210 = vcmask 1047558
  %v211 = vsel %vm210, %v209, %v206
  %212 = vrot.lane.b32.xlu0 %v211, 64
  %v213 = vpop.permute.xlu0 %212
  %vm214 = vcmask 654848
  %215 = vst.msk [vmem:[%s1] sm:$0xff] %vm214, %v213
  %s216 = scalar_lea.vmem %s0, 12
  %s217 = smov 3
  %v218 = vld [vmem:[%s216] ss:$16 sm:%s217]
  %s219 = scalar_lea.vmem %s0, 12
  %s220 = smov 12
  %v221 = vld [vmem:[%s219] ss:$16 sm:%s220]
  %vm222 = vcmask 1043458
  %v223 = vsel %vm222, %v221, %v218
  %s224 = scalar_lea.vmem %s0, 12
  %s225 = smov 48
  %v226 = vld [vmem:[%s224] ss:$16 sm:%s225]
  %vm227 = vcmask 1045508
  %v228 = vsel %vm227, %v226, %v223
  %s229 = scalar_lea.vmem %s0, 12
  %s230 = smov 192
  %v231 = vld [vmem:[%s229] ss:$16 sm:%s230]
  %vm232 = vcmask 1047558
  %v233 = vsel %vm232, %v231, %v228
  %234 = vrot.lane.b32.xlu0 %v233, 64
  %v235 = vpop.permute.xlu0 %234
  %vm236 = vcmask 654848
  %s237 = scalar_lea.vmem %s1, 8
  %238 = vst.msk [vmem:[%s237] sm:$0xff] %vm236, %v235
  %s239 = scalar_lea.vmem %s0, 132
  %s240 = smov 3
  %v241 = vld [vmem:[%s239] ss:$8 sm:%s240]
  %242 = vrot.lane.b32.xlu0 %v241, 64
  %v243 = vpop.permute.xlu0 %242
  %vm244 = vcmask 654848
  %s245 = scalar_lea.vmem %s1, 16
  %246 = vst.msk [vmem:[%s245] ss:$8 sm:$0x3] %vm244, %v243
  %s247 = scalar_lea.vmem %s0, 3
  %s248 = smov 3
  %v249 = vld [vmem:[%s247] ss:$16 sm:%s248]
  %s250 = scalar_lea.vmem %s0, 3
  %s251 = smov 12
  %v252 = vld [vmem:[%s250] ss:$16 sm:%s251]
  %vm253 = vcmask 1043458
  %v254 = vsel %vm253, %v252, %v249
  %s255 = scalar_lea.vmem %s0, 3
  %s256 = smov 48
  %v257 = vld [vmem:[%s255] ss:$16 sm:%s256]
  %vm258 = vcmask 1045508
  %v259 = vsel %vm258, %v257, %v254
  %s260 = scalar_lea.vmem %s0, 3
  %s261 = smov 192
  %v262 = vld [vmem:[%s260] ss:$16 sm:%s261]
  %vm263 = vcmask 1047558
  %v264 = vsel %vm263, %v262, %v259
  %265 = vrot.lane.b32.xlu0 %v264, 48
  %v266 = vpop.permute.xlu0 %265
  %vm267 = vcmask 523648
  %268 = vst.msk [vmem:[%s1] sm:$0xff] %vm267, %v266
  %s269 = scalar_lea.vmem %s0, 11
  %s270 = smov 3
  %v271 = vld [vmem:[%s269] ss:$16 sm:%s270]
  %s272 = scalar_lea.vmem %s0, 11
  %s273 = smov 12
  %v274 = vld [vmem:[%s272] ss:$16 sm:%s273]
  %vm275 = vcmask 1043458
  %v276 = vsel %vm275, %v274, %v271
  %s277 = scalar_lea.vmem %s0, 11
  %s278 = smov 48
  %v279 = vld [vmem:[%s277] ss:$16 sm:%s278]
  %vm280 = vcmask 1045508
  %v281 = vsel %vm280, %v279, %v276
  %s282 = scalar_lea.vmem %s0, 11
  %s283 = smov 192
  %v284 = vld [vmem:[%s282] ss:$16 sm:%s283]
  %vm285 = vcmask 1047558
  %v286 = vsel %vm285, %v284, %v281
  %287 = vrot.lane.b32.xlu0 %v286, 48
  %v288 = vpop.permute.xlu0 %287
  %vm289 = vcmask 523648
  %s290 = scalar_lea.vmem %s1, 8
  %291 = vst.msk [vmem:[%s290] sm:$0xff] %vm289, %v288
  %s292 = scalar_lea.vmem %s0, 131
  %s293 = smov 3
  %v294 = vld [vmem:[%s292] ss:$8 sm:%s293]
  %295 = vrot.lane.b32.xlu0 %v294, 48
  %v296 = vpop.permute.xlu0 %295
  %vm297 = vcmask 523648
  %s298 = scalar_lea.vmem %s1, 16
  %299 = vst.msk [vmem:[%s298] ss:$8 sm:$0x3] %vm297, %v296
  %s300 = scalar_lea.vmem %s0, 2
  %s301 = smov 3
  %v302 = vld [vmem:[%s300] ss:$16 sm:%s301]
  %s303 = scalar_lea.vmem %s0, 2
  %s304 = smov 12
  %v305 = vld [vmem:[%s303] ss:$16 sm:%s304]
  %vm306 = vcmask 1043458
  %v307 = vsel %vm306, %v305, %v302
  %s308 = scalar_lea.vmem %s0, 2
  %s309 = smov 48
  %v310 = vld [vmem:[%s308] ss:$16 sm:%s309]
  %vm311 = vcmask 1045508
  %v312 = vsel %vm311, %v310, %v307
  %s313 = scalar_lea.vmem %s0, 2
  %s314 = smov 192
  %v315 = vld [vmem:[%s313] ss:$16 sm:%s314]
  %vm316 = vcmask 1047558
  %v317 = vsel %vm316, %v315, %v312
  %318 = vrot.lane.b32.xlu0 %v317, 32
  %v319 = vpop.permute.xlu0 %318
  %vm320 = vcmask 392448
  %321 = vst.msk [vmem:[%s1] sm:$0xff] %vm320, %v319
  %s322 = scalar_lea.vmem %s0, 10
  %s323 = smov 3
  %v324 = vld [vmem:[%s322] ss:$16 sm:%s323]
  %s325 = scalar_lea.vmem %s0, 10
  %s326 = smov 12
  %v327 = vld [vmem:[%s325] ss:$16 sm:%s326]
  %vm328 = vcmask 1043458
  %v329 = vsel %vm328, %v327, %v324
  %s330 = scalar_lea.vmem %s0, 10
  %s331 = smov 48
  %v332 = vld [vmem:[%s330] ss:$16 sm:%s331]
  %vm333 = vcmask 1045508
  %v334 = vsel %vm333, %v332, %v329
  %s335 = scalar_lea.vmem %s0, 10
  %s336 = smov 192
  %v337 = vld [vmem:[%s335] ss:$16 sm:%s336]
  %vm338 = vcmask 1047558
  %v339 = vsel %vm338, %v337, %v334
  %340 = vrot.lane.b32.xlu0 %v339, 32
  %v341 = vpop.permute.xlu0 %340
  %vm342 = vcmask 392448
  %s343 = scalar_lea.vmem %s1, 8
  %344 = vst.msk [vmem:[%s343] sm:$0xff] %vm342, %v341
  %s345 = scalar_lea.vmem %s0, 130
  %s346 = smov 3
  %v347 = vld [vmem:[%s345] ss:$8 sm:%s346]
  %348 = vrot.lane.b32.xlu0 %v347, 32
  %v349 = vpop.permute.xlu0 %348
  %vm350 = vcmask 392448
  %s351 = scalar_lea.vmem %s1, 16
  %352 = vst.msk [vmem:[%s351] ss:$8 sm:$0x3] %vm350, %v349
  %s353 = scalar_lea.vmem %s0, 1
  %s354 = smov 3
  %v355 = vld [vmem:[%s353] ss:$16 sm:%s354]
  %s356 = scalar_lea.vmem %s0, 1
  %s357 = smov 12
  %v358 = vld [vmem:[%s356] ss:$16 sm:%s357]
  %vm359 = vcmask 1043458
  %v360 = vsel %vm359, %v358, %v355
  %s361 = scalar_lea.vmem %s0, 1
  %s362 = smov 48
  %v363 = vld [vmem:[%s361] ss:$16 sm:%s362]
  %vm364 = vcmask 1045508
  %v365 = vsel %vm364, %v363, %v360
  %s366 = scalar_lea.vmem %s0, 1
  %s367 = smov 192
  %v368 = vld [vmem:[%s366] ss:$16 sm:%s367]
  %vm369 = vcmask 1047558
  %v370 = vsel %vm369, %v368, %v365
  %371 = vrot.lane.b32.xlu0 %v370, 16
  %v372 = vpop.permute.xlu0 %371
  %vm373 = vcmask 261248
  %374 = vst.msk [vmem:[%s1] sm:$0xff] %vm373, %v372
  %s375 = scalar_lea.vmem %s0, 9
  %s376 = smov 3
  %v377 = vld [vmem:[%s375] ss:$16 sm:%s376]
  %s378 = scalar_lea.vmem %s0, 9
  %s379 = smov 12
  %v380 = vld [vmem:[%s378] ss:$16 sm:%s379]
  %vm381 = vcmask 1043458
  %v382 = vsel %vm381, %v380, %v377
  %s383 = scalar_lea.vmem %s0, 9
  %s384 = smov 48
  %v385 = vld [vmem:[%s383] ss:$16 sm:%s384]
  %vm386 = vcmask 1045508
  %v387 = vsel %vm386, %v385, %v382
  %s388 = scalar_lea.vmem %s0, 9
  %s389 = smov 192
  %v390 = vld [vmem:[%s388] ss:$16 sm:%s389]
  %vm391 = vcmask 1047558
  %v392 = vsel %vm391, %v390, %v387
  %393 = vrot.lane.b32.xlu0 %v392, 16
  %v394 = vpop.permute.xlu0 %393
  %vm395 = vcmask 261248
  %s396 = scalar_lea.vmem %s1, 8
  %397 = vst.msk [vmem:[%s396] sm:$0xff] %vm395, %v394
  %s398 = scalar_lea.vmem %s0, 129
  %s399 = smov 3
  %v400 = vld [vmem:[%s398] ss:$8 sm:%s399]
  %401 = vrot.lane.b32.xlu0 %v400, 16
  %v402 = vpop.permute.xlu0 %401
  %vm403 = vcmask 261248
  %s404 = scalar_lea.vmem %s1, 16
  %405 = vst.msk [vmem:[%s404] ss:$8 sm:$0x3] %vm403, %v402

// kernel: resblock_forward.1
$region0: #{resblock_forward.1}
  #allocation0 [shape = 'u32[]', space=smem, size = 0x4, offset = 0x4, fixed_abs, tag = 'smem constant byte address 0x4 - core index']
  #allocation1 [shape = 'u32[144,128]{1,0:T(1,128)}', space=vmem, size = 0x12000, scoped, tag = 'internal scratch']
  #allocation2 [shape = 'f32[18,256]{1,0:T(8,128)}', space=vmem, size = 0x6000, scoped, tag = 'scratch operand']
  %s0 = inlined_call_operand.vmem [shape: f32[2,16,256], index: 0, kind: input, shape index: {}]
  %s1 = inlined_call_operand.vmem [shape: f32[9,256], index: 1, kind: input, shape index: {}]
  %s2 = inlined_call_operand.vmem [shape: f32[4,256], index: 2, kind: input, shape index: {}]
  %s3 = inlined_call_operand.vmem [shape: bf16[256,256], index: 3, kind: input, shape index: {}]
  %s4 = inlined_call_operand.vmem [shape: f32[9,256], index: 4, kind: input, shape index: {}]
  %s5 = inlined_call_operand.vmem [shape: f32[4,256], index: 5, kind: input, shape index: {}]
  %s6 = inlined_call_operand.vmem [shape: bf16[256,256], index: 6, kind: input, shape index: {}]
  %s7 = inlined_call_operand.vmem [shape: f32[2,16,256], index: 7, kind: output, shape index: {}]
  %s8 = sld [smem:[#allocation0]]
  $region61: #{resblock_forward.1} parent=0
    _
  %s10 = ssub.s32 1, %s8
  %s11 = scalar_select 0, %s10, %s8
  loop: start=0, step=1, limit=4
  $region2: #{resblock_forward.1} parent=0 // loop_pre_header
    _
  $region3: #{resblock_forward.1} parent=0 // loop_header
    %s13 = sphi 0, %s17
    %p14 = scmp.ge.s32.totalorder %s13, 4
    %s23 = sphi 0, %s25
    %s26 = sphi 0, %s23
    %s27 = sphi 0, %s26
    %s43 = sphi 0, %s27
    %s47 = sphi 0, %s47
    %s49 = sphi 0, %s47
    %s50 = sphi 0, %s49
    %s64 = sphi 0, %s50
    %s68 = sphi 0, %s68
    %s70 = sphi 0, %s68
    %s71 = sphi 0, %s70
    %s85 = sphi 0, %s71
    %s89 = sphi 0, %s89
    %s91 = sphi 0, %s89
    %s92 = sphi 0, %s91
    %s106 = sphi 0, %s92
    %s110 = sphi 0, %s110
    %s112 = sphi 0, %s110
    %s113 = sphi 0, %s112
    %s127 = sphi 0, %s113
    %s131 = sphi 0, %s131
    %s133 = sphi 0, %s131
    %s134 = sphi 0, %s133
    %s148 = sphi 0, %s134
    %s152 = sphi 0, %s152
    %s154 = sphi 0, %s152
    %s155 = sphi 0, %s154
    %s169 = sphi 0, %s155
    %s175 = sphi 0, %s177
    %s178 = sphi 0, %s175
    %s179 = sphi 0, %s178
    %s195 = sphi 0, %s179
  $region4: #{resblock_forward.1} parent=0 // loop_header_branch
    %16 = sbr.rel (%p14) target = $region8
  $region5: #{resblock_forward.1} parent=0 // loop_body
    %s18 = ssub.s32 %s13, 1
    %s19 = ssub.s32 %s13, 2
    %s20 = sadd.s32 %s13, 1
    %s21 = ssub.s32 %s13, %s20
    %p22 = scmp.eq.s32.totalorder %s21, 0
    %s24 = sadd.s32 %s23, 1
    %s25 = scalar_select %p22, %s23, %s24
    %p28 = pneg %p22
    %p29 = scmp.eq.s32.totalorder %s13, 1
    %p30 = por %p28, %p29
    %p31 = scmp.ne.s32.totalorder %s23, %s26
    %p32 = scmp.eq.s32.totalorder %s13, 0
    %p33 = por %p31, %p32
    %p34 = scmp.ne.s32.totalorder %s23, %s26
    %p35 = scmp.eq.s32.totalorder %s18, 1
    %p36 = por %p34, %p35
    %p37 = scmp.ne.s32.totalorder %s26, %s27
    %p38 = scmp.eq.s32.totalorder %s18, 0
    %p39 = por %p37, %p38
    %p40 = scmp.ne.s32.totalorder %s26, %s27
    %p41 = scmp.eq.s32.totalorder %s19, 1
    %p42 = por %p40, %p41
    %p44 = scmp.ne.s32.totalorder %s27, %s43
    %p45 = scmp.eq.s32.totalorder %s19, 0
    %p46 = por %p44, %p45
    %s48 = sadd.s32 %s47, 1
    %p51 = scmp.eq.s32.totalorder %s13, 1
    %p52 = scmp.ne.s32.totalorder %s47, %s49
    %p53 = scmp.eq.s32.totalorder %s13, 0
    %p54 = por %p52, %p53
    %p55 = scmp.ne.s32.totalorder %s47, %s49
    %p56 = scmp.eq.s32.totalorder %s18, 1
    %p57 = por %p55, %p56
    %p58 = scmp.ne.s32.totalorder %s49, %s50
    %p59 = scmp.eq.s32.totalorder %s18, 0
    %p60 = por %p58, %p59
    %p61 = scmp.ne.s32.totalorder %s49, %s50
    %p62 = scmp.eq.s32.totalorder %s19, 1
    %p63 = por %p61, %p62
    %p65 = scmp.ne.s32.totalorder %s50, %s64
    %p66 = scmp.eq.s32.totalorder %s19, 0
    %p67 = por %p65, %p66
    %s69 = sadd.s32 %s68, 1
    %p72 = scmp.eq.s32.totalorder %s13, 1
    %p73 = scmp.ne.s32.totalorder %s68, %s70
    %p74 = scmp.eq.s32.totalorder %s13, 0
    %p75 = por %p73, %p74
    %p76 = scmp.ne.s32.totalorder %s68, %s70
    %p77 = scmp.eq.s32.totalorder %s18, 1
    %p78 = por %p76, %p77
    %p79 = scmp.ne.s32.totalorder %s70, %s71
    %p80 = scmp.eq.s32.totalorder %s18, 0
    %p81 = por %p79, %p80
    %p82 = scmp.ne.s32.totalorder %s70, %s71
    %p83 = scmp.eq.s32.totalorder %s19, 1
    %p84 = por %p82, %p83
    %p86 = scmp.ne.s32.totalorder %s71, %s85
    %p87 = scmp.eq.s32.totalorder %s19, 0
    %p88 = por %p86, %p87
    %s90 = sadd.s32 %s89, 1
    %p93 = scmp.eq.s32.totalorder %s13, 1
    %p94 = scmp.ne.s32.totalorder %s89, %s91
    %p95 = scmp.eq.s32.totalorder %s13, 0
    %p96 = por %p94, %p95
    %p97 = scmp.ne.s32.totalorder %s89, %s91
    %p98 = scmp.eq.s32.totalorder %s18, 1
    %p99 = por %p97, %p98
    %p100 = scmp.ne.s32.totalorder %s91, %s92
    %p101 = scmp.eq.s32.totalorder %s18, 0
    %p102 = por %p100, %p101
    %p103 = scmp.ne.s32.totalorder %s91, %s92
    %p104 = scmp.eq.s32.totalorder %s19, 1
    %p105 = por %p103, %p104
    %p107 = scmp.ne.s32.totalorder %s92, %s106
    %p108 = scmp.eq.s32.totalorder %s19, 0
    %p109 = por %p107, %p108
    %s111 = sadd.s32 %s110, 1
    %p114 = scmp.eq.s32.totalorder %s13, 1
    %p115 = scmp.ne.s32.totalorder %s110, %s112
    %p116 = scmp.eq.s32.totalorder %s13, 0
    %p117 = por %p115, %p116
    %p118 = scmp.ne.s32.totalorder %s110, %s112
    %p119 = scmp.eq.s32.totalorder %s18, 1
    %p120 = por %p118, %p119
    %p121 = scmp.ne.s32.totalorder %s112, %s113
    %p122 = scmp.eq.s32.totalorder %s18, 0
    %p123 = por %p121, %p122
    %p124 = scmp.ne.s32.totalorder %s112, %s113
    %p125 = scmp.eq.s32.totalorder %s19, 1
    %p126 = por %p124, %p125
    %p128 = scmp.ne.s32.totalorder %s113, %s127
    %p129 = scmp.eq.s32.totalorder %s19, 0
    %p130 = por %p128, %p129
    %s132 = sadd.s32 %s131, 1
    %p135 = scmp.eq.s32.totalorder %s13, 1
    %p136 = scmp.ne.s32.totalorder %s131, %s133
    %p137 = scmp.eq.s32.totalorder %s13, 0
    %p138 = por %p136, %p137
    %p139 = scmp.ne.s32.totalorder %s131, %s133
    %p140 = scmp.eq.s32.totalorder %s18, 1
    %p141 = por %p139, %p140
    %p142 = scmp.ne.s32.totalorder %s133, %s134
    %p143 = scmp.eq.s32.totalorder %s18, 0
    %p144 = por %p142, %p143
    %p145 = scmp.ne.s32.totalorder %s133, %s134
    %p146 = scmp.eq.s32.totalorder %s19, 1
    %p147 = por %p145, %p146
    %p149 = scmp.ne.s32.totalorder %s134, %s148
    %p150 = scmp.eq.s32.totalorder %s19, 0
    %p151 = por %p149, %p150
    %s153 = sadd.s32 %s152, 1
    %p156 = scmp.eq.s32.totalorder %s13, 1
    %p157 = scmp.ne.s32.totalorder %s152, %s154
    %p158 = scmp.eq.s32.totalorder %s13, 0
    %p159 = por %p157, %p158
    %p160 = scmp.ne.s32.totalorder %s152, %s154
    %p161 = scmp.eq.s32.totalorder %s18, 1
    %p162 = por %p160, %p161
    %p163 = scmp.ne.s32.totalorder %s154, %s155
    %p164 = scmp.eq.s32.totalorder %s18, 0
    %p165 = por %p163, %p164
    %p166 = scmp.ne.s32.totalorder %s154, %s155
    %p167 = scmp.eq.s32.totalorder %s19, 1
    %p168 = por %p166, %p167
    %p170 = scmp.ne.s32.totalorder %s155, %s169
    %p171 = scmp.eq.s32.totalorder %s19, 0
    %p172 = por %p170, %p171
    %s173 = ssub.s32 %s13, %s20
    %p174 = scmp.eq.s32.totalorder %s173, 0
    %s176 = sadd.s32 %s175, 1
    %s177 = scalar_select %p174, %s175, %s176
    %p180 = pneg %p174
    %p181 = scmp.eq.s32.totalorder %s13, 1
    %p182 = por %p180, %p181
    %p183 = scmp.ne.s32.totalorder %s175, %s178
    %p184 = scmp.eq.s32.totalorder %s13, 0
    %p185 = por %p183, %p184
    %p186 = scmp.ne.s32.totalorder %s175, %s178
    %p187 = scmp.eq.s32.totalorder %s18, 1
    %p188 = por %p186, %p187
    %p189 = scmp.ne.s32.totalorder %s178, %s179
    %p190 = scmp.eq.s32.totalorder %s18, 0
    %p191 = por %p189, %p190
    %p192 = scmp.ne.s32.totalorder %s178, %s179
    %p193 = scmp.eq.s32.totalorder %s19, 1
    %p194 = por %p192, %p193
    %p196 = scmp.ne.s32.totalorder %s179, %s195
    %p197 = scmp.eq.s32.totalorder %s19, 0
    %p198 = por %p196, %p197
    %p199 = scmp.le.s32.totalorder 1, %s13
    %p200 = scmp.lt.s32.totalorder %s13, 3
    %p201 = pnand %p199, %p200
    %p202 = pneg %p201
    // Predicated region
    $region9: #{resblock_forward.1} parent=5 // pred_check
      _
    $region10: #{resblock_forward.1} parent=5 // pred_check_branch
      %204 = sbr.rel (%p201) target = $region12
    $region11: #{resblock_forward.1} parent=5 // pred_region
      %s205 = ssub.s32 %s13, 1
      // Predicated region
      $region13: #{resblock_forward.1} parent=11 // pred_check
        %p206 = pneg %p60
      $region14: #{resblock_forward.1} parent=11 // pred_check_branch
        %208 = sbr.rel (%p206) target = $region16
      $region15: #{resblock_forward.1} parent=11 // pred_region
        _
      $region16: #{resblock_forward.1} parent=11 // pred_fallthru
        _
      // Predicated region
      $region17: #{resblock_forward.1} parent=11 // pred_check
        %p209 = pneg %p81
      $region18: #{resblock_forward.1} parent=11 // pred_check_branch
        %211 = sbr.rel (%p209) target = $region20
      $region19: #{resblock_forward.1} parent=11 // pred_region
        _
      $region20: #{resblock_forward.1} parent=11 // pred_fallthru
        _
      // Predicated region
      $region21: #{resblock_forward.1} parent=11 // pred_check
        %p212 = pneg %p102
      $region22: #{resblock_forward.1} parent=11 // pred_check_branch
        %214 = sbr.rel (%p212) target = $region24
      $region23: #{resblock_forward.1} parent=11 // pred_region
        _
      $region24: #{resblock_forward.1} parent=11 // pred_fallthru
        _
      // Predicated region
      $region25: #{resblock_forward.1} parent=11 // pred_check
        %p215 = pneg %p123
      $region26: #{resblock_forward.1} parent=11 // pred_check_branch
        %217 = sbr.rel (%p215) target = $region28
      $region27: #{resblock_forward.1} parent=11 // pred_region
        _
      $region28: #{resblock_forward.1} parent=11 // pred_fallthru
        _
      // Predicated region
      $region29: #{resblock_forward.1} parent=11 // pred_check
        %p218 = pneg %p144
      $region30: #{resblock_forward.1} parent=11 // pred_check_branch
        %220 = sbr.rel (%p218) target = $region32
      $region31: #{resblock_forward.1} parent=11 // pred_region
        _
      $region32: #{resblock_forward.1} parent=11 // pred_fallthru
        _
      // Predicated region
      $region33: #{resblock_forward.1} parent=11 // pred_check
        %p221 = pneg %p165
      $region34: #{resblock_forward.1} parent=11 // pred_check_branch
        %223 = sbr.rel (%p221) target = $region36
      $region35: #{resblock_forward.1} parent=11 // pred_region
        _
      $region36: #{resblock_forward.1} parent=11 // pred_fallthru
        _
    $region12: #{resblock_forward.1} parent=5 // pred_fallthru
      _
    %p224 = scmp.lt.s32.totalorder %s13, 2
    // Predicated region
    $region37: #{resblock_forward.1} parent=5 // pred_check
      %p225 = pneg %p224
    $region38: #{resblock_forward.1} parent=5 // pred_check_branch
      %227 = sbr.rel (%p225) target = $region40
    $region39: #{resblock_forward.1} parent=5 // pred_region
      // Predicated region
      $region41: #{resblock_forward.1} parent=39 // pred_check
        %p228 = pneg %p33
      $region42: #{resblock_forward.1} parent=39 // pred_check_branch
        %230 = sbr.rel (%p228) target = $region44
      $region43: #{resblock_forward.1} parent=39 // pred_region
        %p231 = scmp.lt.s32.totalorder %s13, 1
        %s232 = scalar_select %p231, %s13, 1
        %s233 = smul.addr %s232, 4
        %s234 = smul.addr %s233, 8
        %s235 = scalar_lea.vmem %s0, %s234
      $region44: #{resblock_forward.1} parent=39 // pred_fallthru
        _
    $region40: #{resblock_forward.1} parent=5 // pred_fallthru
      _
    %p236 = scmp.le.s32.totalorder 1, %s13
    %p237 = scmp.lt.s32.totalorder %s13, 3
    %p238 = pnand %p236, %p237
    %p239 = pneg %p238
    // Predicated region
    $region45: #{resblock_forward.1} parent=5 // pred_check
      _
    $region46: #{resblock_forward.1} parent=5 // pred_check_branch
      %241 = sbr.rel (%p238) target = $region48
    $region47: #{resblock_forward.1} parent=5 // pred_region
      %s242 = ssub.s32 %s13, 1
      %p243 = scmp.lt.s32.totalorder %s18, 1
      %s244 = scalar_select %p243, %s18, 1
      %s245 = smul.addr %s244, 4
      %s246 = smul.addr %s245, 8
      %s247 = scalar_lea.vmem %s0, %s246
      %p248 = pneg %p39
      %p249 = pneg %p36
      %p250 = pneg %p60
      %p251 = pneg %p57
      %p252 = pneg %p81
      %p253 = pneg %p78
      %p254 = pneg %p102
      %p255 = pneg %p99
      %p256 = pneg %p123
      %p257 = pneg %p120
      %p258 = pneg %p144
      %p259 = pneg %p141
      %p260 = pneg %p165
      %p261 = pneg %p162
      %p262 = pneg %p191
      %p263 = pneg %p188
      %p264 = scmp.lt.s32.totalorder %s18, 1
      %s265 = scalar_select %p264, %s18, 1
      %s266 = smul.addr %s265, 4
      %s267 = smul.addr %s266, 8
      %s268 = scalar_lea.vmem %s7, %s267
      %p269 = scmp.lt.s32.totalorder %s18, 1
      %s270 = scalar_select %p269, %s18, 1
      %s271 = smul.addr %s270, 4
      %s272 = smul.addr %s271, 8
      %s273 = scalar_lea.vmem %s0, %s272
      %p274 = scmp.lt.s32.totalorder %s18, 1
      %s275 = scalar_select %p274, %s18, 1
      %s276 = smul.addr %s275, 4
      %s277 = smul.addr %s276, 8
      %s278 = scalar_lea.vmem %s7, %s277
      %v279 = vlaneseq
      %vm280 = vcmp.ge.s32.totalorder %v279, 0
      %vm281 = vcmp.lt.s32.totalorder %v279, 256
      %vm282 = vmand %vm280, %vm281
      %283 = vst.msk [vmem:[#allocation2] ss:$8 sm:$0x3] %vm282, 0.0
      %284 = vst.msk [vmem:[#allocation2] ss:$8 sm:$0x0] %vm282, 0.0
      %s285 = scalar_lea.vmem [#allocation2], 33
      %286 = vst.msk [vmem:[%s285] ss:$8 sm:$0x3] %vm282, 0.0
      %287 = vst.msk [vmem:[%s285] ss:$8 sm:$0x0] %vm282, 0.0
      %v288 = vld [vmem:[%s273] sm:$0xff]
      %v289 = vld [vmem:[%s273 + $0x8] sm:$0xff]
      %v290 = vld [vmem:[%s273 + $0x10] sm:$0xff]
      %v291 = vld [vmem:[%s273 + $0x18] sm:$0xff]
      %vm296 = vcmask 1040384
      %v297 = vrot.slane %v288, 7
      %v298 = vrot.slane %v289, 7
      %v299 = vrot.slane %v290, 7
      %v300 = vsel %vm296, %v297, %v299
      %v301 = vrot.slane %v291, 7
      %v302 = vsel %vm296, %v298, %v301
      %309 = vst [vmem:[#allocation2] sm:$0xfe] %v297
      %310 = vst [vmem:[#allocation2 + $0x8] sm:$0xfe] %v298
      %311 = vst [vmem:[#allocation2 + $0x10] sm:$0xff] %v300
      %312 = vst [vmem:[#allocation2 + $0x18] sm:$0xff] %v302
      %313 = vst [vmem:[#allocation2 + $0x20] sm:$0x1] %v299
      %314 = vst [vmem:[#allocation2 + $0x28] sm:$0x1] %v301
      %v315 = vld [vmem:[#allocation2] sm:$0xff]
      %v316 = vld [vmem:[#allocation2 + $0x8] sm:$0xff]
      %v317 = vld [vmem:[#allocation2 + $0x10] sm:$0xff]
      %v318 = vld [vmem:[#allocation2 + $0x18] sm:$0xff]
      %319 = vrot.lane.b32.xlu0 %v315, 16
      %v320 = vpop.permute.xlu0 %319
      %321 = vrot.lane.b32.xlu0 %v317, 16
      %v322 = vpop.permute.xlu0 %321
      %323 = vrot.lane.b32.xlu0 %v316, 16
      %v324 = vpop.permute.xlu0 %323
      %325 = vrot.lane.b32.xlu0 %v318, 16
      %v326 = vpop.permute.xlu0 %325
      %v327 = vlaneseq
      %v328 = vand.u32 %v327, 127
      %vm329 = vcmp.lt.s32.totalorder %v328, 16
      %v330 = vsel %vm329, %v320, %v324
      %v331 = vsel %vm329, %v322, %v326
      %v332 = vsel %vm329, %v324, %v320
      %v333 = vsel %vm329, %v326, %v322
      %334 = vrot.lane.b32.xlu0 %v315, 112
      %v335 = vpop.permute.xlu0 %334
      %336 = vrot.lane.b32.xlu0 %v317, 112
      %v337 = vpop.permute.xlu0 %336
      %338 = vrot.lane.b32.xlu0 %v316, 112
      %v339 = vpop.permute.xlu0 %338
      %340 = vrot.lane.b32.xlu0 %v318, 112
      %v341 = vpop.permute.xlu0 %340
      %vm342 = vcmp.lt.s32.totalorder %v328, 112
      %v343 = vsel %vm342, %v335, %v339
      %v344 = vsel %vm342, %v337, %v341
      %v345 = vsel %vm342, %v339, %v335
      %v346 = vsel %vm342, %v341, %v337
      %v347 = vld [vmem:[%s1] ss:$8 sm:$0x3]
      %v349 = vlaneseq
      %v350 = vshrl.u32 %v349, 7
      %v351 = vsub.s32 0, %v350
      %v352 = vrot.slane %v347, %v351
      %v353 = vlaneseq
      %v354 = vshrl.u32 %v353, 7
      %v355 = vsub.s32 1, %v354
      %v356 = vrot.slane %v347, %v355
      %v359 = vmul.f32 %v332, %v352
      %v360 = vmul.f32 %v330, %v356
      %v361 = vmul.f32 %v333, %v352
      %v362 = vmul.f32 %v331, %v356
      %s363 = scalar_lea.vmem %s1, 1
      %v364 = vld [vmem:[%s363] ss:$8 sm:$0x3]
      %v366 = vlaneseq
      %v367 = vshrl.u32 %v366, 7
      %v368 = vsub.s32 0, %v367
      %v369 = vrot.slane %v364, %v368
      %v370 = vlaneseq
      %v371 = vshrl.u32 %v370, 7
      %v372 = vsub.s32 1, %v371
      %v373 = vrot.slane %v364, %v372
      %v376 = vmul.f32 %v315, %v369
      %v377 = vmul.f32 %v316, %v373
      %v378 = vmul.f32 %v317, %v369
      %v379 = vmul.f32 %v318, %v373
      %v380 = vadd.f32 %v359, %v376
      %v381 = vadd.f32 %v360, %v377
      %v382 = vadd.f32 %v361, %v378
      %v383 = vadd.f32 %v362, %v379
      %s384 = scalar_lea.vmem %s1, 2
      %v385 = vld [vmem:[%s384] ss:$8 sm:$0x3]
      %v387 = vlaneseq
      %v388 = vshrl.u32 %v387, 7
      %v389 = vsub.s32 0, %v388
      %v390 = vrot.slane %v385, %v389
      %v391 = vlaneseq
      %v392 = vshrl.u32 %v391, 7
      %v393 = vsub.s32 1, %v392
      %v394 = vrot.slane %v385, %v393
      %v397 = vmul.f32 %v343, %v390
      %v398 = vmul.f32 %v345, %v394
      %v399 = vmul.f32 %v344, %v390
      %v400 = vmul.f32 %v346, %v394
      %v401 = vadd.f32 %v380, %v397
      %v402 = vadd.f32 %v381, %v398
      %v403 = vadd.f32 %v382, %v399
      %v404 = vadd.f32 %v383, %v400
      %v405 = vld [vmem:[#allocation2] sm:$0xfe]
      %v406 = vld [vmem:[#allocation2 + $0x8] sm:$0xfe]
      %v407 = vld [vmem:[#allocation2 + $0x10] sm:$0xff]
      %v408 = vld [vmem:[#allocation2 + $0x18] sm:$0xff]
      %v409 = vld [vmem:[#allocation2 + $0x20] sm:$0x1]
      %v410 = vld [vmem:[#allocation2 + $0x28] sm:$0x1]
      %vm417 = vcmask 1046528
      %v418 = vrot.slane %v405, 1
      %v419 = vrot.slane %v407, 1
      %v420 = vsel %vm417, %v418, %v419
      %v421 = vrot.slane %v406, 1
      %v422 = vrot.slane %v408, 1
      %v423 = vsel %vm417, %v421, %v422
      %v424 = vrot.slane %v409, 1
      %v425 = vsel %vm417, %v419, %v424
      %v426 = vrot.slane %v410, 1
      %v427 = vsel %vm417, %v422, %v426
      %432 = vrot.lane.b32.xlu0 %v420, 16
      %v433 = vpop.permute.xlu0 %432
      %434 = vrot.lane.b32.xlu0 %v425, 16
      %v435 = vpop.permute.xlu0 %434
      %436 = vrot.lane.b32.xlu0 %v423, 16
      %v437 = vpop.permute.xlu0 %436
      %438 = vrot.lane.b32.xlu0 %v427, 16
      %v439 = vpop.permute.xlu0 %438
      %v440 = vsel %vm329, %v433, %v437
      %v441 = vsel %vm329, %v435, %v439
      %v442 = vsel %vm329, %v437, %v433
      %v443 = vsel %vm329, %v439, %v435
      %444 = vrot.lane.b32.xlu0 %v420, 112
      %v445 = vpop.permute.xlu0 %444
      %446 = vrot.lane.b32.xlu0 %v425, 112
      %v447 = vpop.permute.xlu0 %446
      %448 = vrot.lane.b32.xlu0 %v423, 112
      %v449 = vpop.permute.xlu0 %448
      %450 = vrot.lane.b32.xlu0 %v427, 112
      %v451 = vpop.permute.xlu0 %450
      %v452 = vsel %vm342, %v445, %v449
      %v453 = vsel %vm342, %v447, %v451
      %v454 = vsel %vm342, %v449, %v445
      %v455 = vsel %vm342, %v451, %v447
      %s456 = scalar_lea.vmem %s1, 3
      %v457 = vld [vmem:[%s456] ss:$8 sm:$0x3]
      %v459 = vlaneseq
      %v460 = vshrl.u32 %v459, 7
      %v461 = vsub.s32 0, %v460
      %v462 = vrot.slane %v457, %v461
      %v463 = vlaneseq
      %v464 = vshrl.u32 %v463, 7
      %v465 = vsub.s32 1, %v464
      %v466 = vrot.slane %v457, %v465
      %v469 = vmul.f32 %v442, %v462
      %v470 = vmul.f32 %v440, %v466
      %v471 = vmul.f32 %v443, %v462
      %v472 = vmul.f32 %v441, %v466
      %s473 = scalar_lea.vmem %s1, 4
      %v474 = vld [vmem:[%s473] ss:$8 sm:$0x3]
      %v476 = vlaneseq
      %v477 = vshrl.u32 %v476, 7
      %v478 = vsub.s32 0, %v477
      %v479 = vrot.slane %v474, %v478
      %v480 = vlaneseq
      %v481 = vshrl.u32 %v480, 7
      %v482 = vsub.s32 1, %v481
      %v483 = vrot.slane %v474, %v482
      %v486 = vmul.f32 %v405, %v479
      %v487 = vmul.f32 %v406, %v483
      %v488 = vmul.f32 %v407, %v479
      %v489 = vmul.f32 %v408, %v483
      %v490 = vmul.f32 %v409, %v479
      %v491 = vmul.f32 %v410, %v483
      %v498 = vrot.slane %v486, 1
      %v499 = vrot.slane %v488, 1
      %v500 = vsel %vm417, %v498, %v499
      %v501 = vrot.slane %v487, 1
      %v502 = vrot.slane %v489, 1
      %v503 = vsel %vm417, %v501, %v502
      %v504 = vrot.slane %v490, 1
      %v505 = vsel %vm417, %v499, %v504
      %v506 = vrot.slane %v491, 1
      %v507 = vsel %vm417, %v502, %v506
      %v512 = vadd.f32 %v469, %v500
      %v513 = vadd.f32 %v470, %v503
      %v514 = vadd.f32 %v471, %v505
      %v515 = vadd.f32 %v472, %v507
      %s516 = scalar_lea.vmem %s1, 5
      %v517 = vld [vmem:[%s516] ss:$8 sm:$0x3]
      %v519 = vlaneseq
      %v520 = vshrl.u32 %v519, 7
      %v521 = vsub.s32 0, %v520
      %v522 = vrot.slane %v517, %v521
      %v523 = vlaneseq
      %v524 = vshrl.u32 %v523, 7
      %v525 = vsub.s32 1, %v524
      %v526 = vrot.slane %v517, %v525
      %v529 = vmul.f32 %v452, %v522
      %v530 = vmul.f32 %v454, %v526
      %v531 = vmul.f32 %v453, %v522
      %v532 = vmul.f32 %v455, %v526
      %v533 = vadd.f32 %v512, %v529
      %v534 = vadd.f32 %v513, %v530
      %v535 = vadd.f32 %v514, %v531
      %v536 = vadd.f32 %v515, %v532
      %v537 = vadd.f32 %v401, %v533
      %v538 = vadd.f32 %v402, %v534
      %v539 = vadd.f32 %v403, %v535
      %v540 = vadd.f32 %v404, %v536
      %v541 = vld [vmem:[#allocation2] sm:$0xfc]
      %v542 = vld [vmem:[#allocation2 + $0x8] sm:$0xfc]
      %v543 = vld [vmem:[#allocation2 + $0x20] sm:$0x3]
      %v544 = vld [vmem:[#allocation2 + $0x28] sm:$0x3]
      %vm549 = vcmask 1045504
      %v550 = vrot.slane %v541, 2
      %v551 = vrot.slane %v407, 2
      %v552 = vsel %vm549, %v550, %v551
      %v553 = vrot.slane %v542, 2
      %v554 = vrot.slane %v408, 2
      %v555 = vsel %vm549, %v553, %v554
      %v556 = vrot.slane %v543, 2
      %v557 = vsel %vm549, %v551, %v556
      %v558 = vrot.slane %v544, 2
      %v559 = vsel %vm549, %v554, %v558
      %564 = vrot.lane.b32.xlu0 %v552, 16
      %v565 = vpop.permute.xlu0 %564
      %566 = vrot.lane.b32.xlu0 %v557, 16
      %v567 = vpop.permute.xlu0 %566
      %568 = vrot.lane.b32.xlu0 %v555, 16
      %v569 = vpop.permute.xlu0 %568
      %570 = vrot.lane.b32.xlu0 %v559, 16
      %v571 = vpop.permute.xlu0 %570
      %v572 = vsel %vm329, %v565, %v569
      %v573 = vsel %vm329, %v567, %v571
      %v574 = vsel %vm329, %v569, %v565
      %v575 = vsel %vm329, %v571, %v567
      %576 = vrot.lane.b32.xlu0 %v552, 112
      %v577 = vpop.permute.xlu0 %576
      %578 = vrot.lane.b32.xlu0 %v557, 112
      %v579 = vpop.permute.xlu0 %578
      %580 = vrot.lane.b32.xlu0 %v555, 112
      %v581 = vpop.permute.xlu0 %580
      %582 = vrot.lane.b32.xlu0 %v559, 112
      %v583 = vpop.permute.xlu0 %582
      %v584 = vsel %vm342, %v577, %v581
      %v585 = vsel %vm342, %v579, %v583
      %v586 = vsel %vm342, %v581, %v577
      %v587 = vsel %vm342, %v583, %v579
      %s588 = scalar_lea.vmem %s1, 6
      %v589 = vld [vmem:[%s588] ss:$8 sm:$0x3]
      %v591 = vlaneseq
      %v592 = vshrl.u32 %v591, 7
      %v593 = vsub.s32 0, %v592
      %v594 = vrot.slane %v589, %v593
      %v595 = vlaneseq
      %v596 = vshrl.u32 %v595, 7
      %v597 = vsub.s32 1, %v596
      %v598 = vrot.slane %v589, %v597
      %v601 = vmul.f32 %v574, %v594
      %v602 = vmul.f32 %v572, %v598
      %v603 = vmul.f32 %v575, %v594
      %v604 = vmul.f32 %v573, %v598
      %s605 = scalar_lea.vmem %s1, 7
      %v606 = vld [vmem:[%s605] ss:$8 sm:$0x3]
      %v608 = vlaneseq
      %v609 = vshrl.u32 %v608, 7
      %v610 = vsub.s32 0, %v609
      %v611 = vrot.slane %v606, %v610
      %v612 = vlaneseq
      %v613 = vshrl.u32 %v612, 7
      %v614 = vsub.s32 1, %v613
      %v615 = vrot.slane %v606, %v614
      %v618 = vmul.f32 %v541, %v611
      %v619 = vmul.f32 %v542, %v615
      %v620 = vmul.f32 %v407, %v611
      %v621 = vmul.f32 %v408, %v615
      %v622 = vmul.f32 %v543, %v611
      %v623 = vmul.f32 %v544, %v615
      %v630 = vrot.slane %v618, 2
      %v631 = vrot.slane %v620, 2
      %v632 = vsel %vm549, %v630, %v631
      %v633 = vrot.slane %v619, 2
      %v634 = vrot.slane %v621, 2
      %v635 = vsel %vm549, %v633, %v634
      %v636 = vrot.slane %v622, 2
      %v637 = vsel %vm549, %v631, %v636
      %v638 = vrot.slane %v623, 2
      %v639 = vsel %vm549, %v634, %v638
      %v644 = vadd.f32 %v601, %v632
      %v645 = vadd.f32 %v602, %v635
      %v646 = vadd.f32 %v603, %v637
      %v647 = vadd.f32 %v604, %v639
      %s648 = scalar_lea.vmem %s1, 16
      %v649 = vld [vmem:[%s648] ss:$8 sm:$0x3]
      %v651 = vlaneseq
      %v652 = vshrl.u32 %v651, 7
      %v653 = vsub.s32 0, %v652
      %v654 = vrot.slane %v649, %v653
      %v655 = vlaneseq
      %v656 = vshrl.u32 %v655, 7
      %v657 = vsub.s32 1, %v656
      %v658 = vrot.slane %v649, %v657
      %v661 = vmul.f32 %v584, %v654
      %v662 = vmul.f32 %v586, %v658
      %v663 = vmul.f32 %v585, %v654
      %v664 = vmul.f32 %v587, %v658
      %v665 = vadd.f32 %v644, %v661
      %v666 = vadd.f32 %v645, %v662
      %v667 = vadd.f32 %v646, %v663
      %v668 = vadd.f32 %v647, %v664
      %v669 = vadd.f32 %v537, %v665
      %v670 = vadd.f32 %v538, %v666
      %v671 = vadd.f32 %v539, %v667
      %v672 = vadd.f32 %v540, %v668
      %v673 = vld [vmem:[%s2] ss:$4 sm:$0x3]
      %v675 = vlaneseq
      %v676 = vshrl.u32 %v675, 7
      %v677 = vsub.s32 0, %v676
      %v678 = vrot.slane %v673, %v677
      %v679 = vlaneseq
      %v680 = vshrl.u32 %v679, 7
      %v681 = vsub.s32 1, %v680
      %v682 = vrot.slane %v673, %v681
      %v685 = vadd.f32 %v669, %v678
      %v686 = vadd.f32 %v670, %v682
      %v687 = vadd.f32 %v671, %v678
      %v688 = vadd.f32 %v672, %v682
      %v689 = vmax.f32 %v685, 0.0
      %v690 = vmax.f32 %v686, 0.0
      %v691 = vmax.f32 %v687, 0.0
      %v692 = vmax.f32 %v688, 0.0
      %v693 = vpack.c.bf16 %v691, %v689
      %v694 = vpack.c.bf16 %v692, %v690
      %v695 = vld [vmem:[%s3] sm:$0xff]
      %v696 = vld [vmem:[%s3 + $0x8] sm:$0xff]
      %v697 = vld [vmem:[%s3 + $0x10] sm:$0xff]
      %v698 = vld [vmem:[%s3 + $0x18] sm:$0xff]
      %v699 = vld [vmem:[%s3 + $0x20] sm:$0xff]
      %v700 = vld [vmem:[%s3 + $0x28] sm:$0xff]
      %v701 = vld [vmem:[%s3 + $0x30] sm:$0xff]
      %v702 = vld [vmem:[%s3 + $0x38] sm:$0xff]
      %v703 = vld [vmem:[%s3 + $0x40] sm:$0xff]
      %v704 = vld [vmem:[%s3 + $0x48] sm:$0xff]
      %v705 = vld [vmem:[%s3 + $0x50] sm:$0xff]
      %v706 = vld [vmem:[%s3 + $0x58] sm:$0xff]
      %v707 = vld [vmem:[%s3 + $0x60] sm:$0xff]
      %v708 = vld [vmem:[%s3 + $0x68] sm:$0xff]
      %v709 = vld [vmem:[%s3 + $0x70] sm:$0xff]
      %v710 = vld [vmem:[%s3 + $0x78] sm:$0xff]
      %v711 = vld [vmem:[%s3 + $0x80] sm:$0xff]
      %v712 = vld [vmem:[%s3 + $0x88] sm:$0xff]
      %v713 = vld [vmem:[%s3 + $0x90] sm:$0xff]
      %v714 = vld [vmem:[%s3 + $0x98] sm:$0xff]
      %v715 = vld [vmem:[%s3 + $0xa0] sm:$0xff]
      %v716 = vld [vmem:[%s3 + $0xa8] sm:$0xff]
      %v717 = vld [vmem:[%s3 + $0xb0] sm:$0xff]
      %v718 = vld [vmem:[%s3 + $0xb8] sm:$0xff]
      %v719 = vld [vmem:[%s3 + $0xc0] sm:$0xff]
      %v720 = vld [vmem:[%s3 + $0xc8] sm:$0xff]
      %v721 = vld [vmem:[%s3 + $0xd0] sm:$0xff]
      %v722 = vld [vmem:[%s3 + $0xd8] sm:$0xff]
      %v723 = vld [vmem:[%s3 + $0xe0] sm:$0xff]
      %v724 = vld [vmem:[%s3 + $0xe8] sm:$0xff]
      %v725 = vld [vmem:[%s3 + $0xf0] sm:$0xff]
      %v726 = vld [vmem:[%s3 + $0xf8] sm:$0xff]
      %s727 = scalar_lea.vmem %s2, 1
      %v728 = vld [vmem:[%s727] ss:$4 sm:$0x3]
      %v730 = vlaneseq
      %v731 = vshrl.u32 %v730, 7
      %v732 = vsub.s32 0, %v731
      %v733 = vrot.slane %v728, %v732
      %v734 = vlaneseq
      %v735 = vshrl.u32 %v734, 7
      %v736 = vsub.s32 1, %v735
      %v737 = vrot.slane %v728, %v736
      %v772 = vunpack.c.l.b16 %v695
      %v773 = vunpack.c.h.b16 %v695
      %v774 = vunpack.c.l.b16 %v696
      %v775 = vunpack.c.h.b16 %v696
      %v776 = vunpack.c.l.b16 %v697
      %v777 = vunpack.c.h.b16 %v697
      %v778 = vunpack.c.l.b16 %v698
      %v779 = vunpack.c.h.b16 %v698
      %v780 = vunpack.c.l.b16 %v699
      %v781 = vunpack.c.h.b16 %v699
      %v782 = vunpack.c.l.b16 %v700
      %v783 = vunpack.c.h.b16 %v700
      %v784 = vunpack.c.l.b16 %v701
      %v785 = vunpack.c.h.b16 %v701
      %v786 = vunpack.c.l.b16 %v702
      %v787 = vunpack.c.h.b16 %v702
      %v788 = vunpack.c.l.b16 %v703
      %v789 = vunpack.c.h.b16 %v703
      %v790 = vunpack.c.l.b16 %v704
      %v791 = vunpack.c.h.b16 %v704
      %v792 = vunpack.c.l.b16 %v705
      %v793 = vunpack.c.h.b16 %v705
      %v794 = vunpack.c.l.b16 %v706
      %v795 = vunpack.c.h.b16 %v706
      %v796 = vunpack.c.l.b16 %v707
      %v797 = vunpack.c.h.b16 %v707
      %v798 = vunpack.c.l.b16 %v708
      %v799 = vunpack.c.h.b16 %v708
      %v800 = vunpack.c.l.b16 %v709
      %v801 = vunpack.c.h.b16 %v709
      %v802 = vunpack.c.l.b16 %v710
      %v803 = vunpack.c.h.b16 %v710
      %v804 = vunpack.c.l.b16 %v711
      %v805 = vunpack.c.h.b16 %v711
      %v806 = vunpack.c.l.b16 %v712
      %v807 = vunpack.c.h.b16 %v712
      %v808 = vunpack.c.l.b16 %v713
      %v809 = vunpack.c.h.b16 %v713
      %v810 = vunpack.c.l.b16 %v714
      %v811 = vunpack.c.h.b16 %v714
      %v812 = vunpack.c.l.b16 %v715
      %v813 = vunpack.c.h.b16 %v715
      %v814 = vunpack.c.l.b16 %v716
      %v815 = vunpack.c.h.b16 %v716
      %v816 = vunpack.c.l.b16 %v717
      %v817 = vunpack.c.h.b16 %v717
      %v818 = vunpack.c.l.b16 %v718
      %v819 = vunpack.c.h.b16 %v718
      %v820 = vunpack.c.l.b16 %v719
      %v821 = vunpack.c.h.b16 %v719
      %v822 = vunpack.c.l.b16 %v720
      %v823 = vunpack.c.h.b16 %v720
      %v824 = vunpack.c.l.b16 %v721
      %v825 = vunpack.c.h.b16 %v721
      %v826 = vunpack.c.l.b16 %v722
      %v827 = vunpack.c.h.b16 %v722
      %v828 = vunpack.c.l.b16 %v723
      %v829 = vunpack.c.h.b16 %v723
      %v830 = vunpack.c.l.b16 %v724
      %v831 = vunpack.c.h.b16 %v724
      %v832 = vunpack.c.l.b16 %v725
      %v833 = vunpack.c.h.b16 %v725
      %v834 = vunpack.c.l.b16 %v726
      %v835 = vunpack.c.h.b16 %v726
      %v836 = vpack.c.b16 %v774, %v772
      %v837 = vpack.c.b16 %v775, %v773
      %v838 = vpack.c.b16 %v778, %v776
      %v839 = vpack.c.b16 %v779, %v777
      %v840 = vpack.c.b16 %v782, %v780
      %v841 = vpack.c.b16 %v783, %v781
      %v842 = vpack.c.b16 %v786, %v784
      %v843 = vpack.c.b16 %v787, %v785
      %v844 = vpack.c.b16 %v790, %v788
      %v845 = vpack.c.b16 %v791, %v789
      %v846 = vpack.c.b16 %v794, %v792
      %v847 = vpack.c.b16 %v795, %v793
      %v848 = vpack.c.b16 %v798, %v796
      %v849 = vpack.c.b16 %v799, %v797
      %v850 = vpack.c.b16 %v802, %v800
      %v851 = vpack.c.b16 %v803, %v801
      %v852 = vpack.c.b16 %v806, %v804
      %v853 = vpack.c.b16 %v807, %v805
      %v854 = vpack.c.b16 %v810, %v808
      %v855 = vpack.c.b16 %v811, %v809
      %v856 = vpack.c.b16 %v814, %v812
      %v857 = vpack.c.b16 %v815, %v813
      %v858 = vpack.c.b16 %v818, %v816
      %v859 = vpack.c.b16 %v819, %v817
      %v860 = vpack.c.b16 %v822, %v820
      %v861 = vpack.c.b16 %v823, %v821
      %v862 = vpack.c.b16 %v826, %v824
      %v863 = vpack.c.b16 %v827, %v825
      %v864 = vpack.c.b16 %v830, %v828
      %v865 = vpack.c.b16 %v831, %v829
      %v866 = vpack.c.b16 %v834, %v832
      %v867 = vpack.c.b16 %v835, %v833
      %900 = vmatprep.subr.bf16.mxu0 %v837
      %901 = vmatpush1.bf16.msra.mxu0 %v836
      %902 = vmatprep.subr.bf16.mxu0 %v839
      %903 = vmatpush1.bf16.msra.mxu0 %v838
      %904 = vmatprep.subr.bf16.mxu0 %v841
      %905 = vmatpush1.bf16.msra.mxu0 %v840
      %906 = vmatprep.subr.bf16.mxu0 %v843
      %907 = vmatpush1.bf16.msra.mxu0 %v842
      %908 = vmatprep.subr.bf16.mxu0 %v845
      %909 = vmatpush1.bf16.msra.mxu0 %v844
      %910 = vmatprep.subr.bf16.mxu0 %v847
      %911 = vmatpush1.bf16.msra.mxu0 %v846
      %912 = vmatprep.subr.bf16.mxu0 %v849
      %913 = vmatpush1.bf16.msra.mxu0 %v848
      %914 = vmatprep.subr.bf16.mxu0 %v851
      %915 = vmatpush1.bf16.msra.mxu0 %v850
      %916 = vmatprep.subr.bf16.mxu0 %v853
      %917 = vmatpush1.bf16.msra.mxu0 %v852
      %918 = vmatprep.subr.bf16.mxu0 %v855
      %919 = vmatpush1.bf16.msra.mxu0 %v854
      %920 = vmatprep.subr.bf16.mxu0 %v857
      %921 = vmatpush1.bf16.msra.mxu0 %v856
      %922 = vmatprep.subr.bf16.mxu0 %v859
      %923 = vmatpush1.bf16.msra.mxu0 %v858
      %924 = vmatprep.subr.bf16.mxu0 %v861
      %925 = vmatpush1.bf16.msra.mxu0 %v860
      %926 = vmatprep.subr.bf16.mxu0 %v863
      %927 = vmatpush1.bf16.msra.mxu0 %v862
      %928 = vmatprep.subr.bf16.mxu0 %v865
      %929 = vmatpush1.bf16.msra.mxu0 %v864
      %930 = vmatprep.subr.bf16.mxu0 %v867
      %931 = vmatpush1.bf16.msra.mxu0 %v866
      %932 = vmatprep.mubr.bf16.mxu0 %v694
      %933 = vmatmul.mubr.bf16.gmra.mrb[0].mxu0 %v693
      %v934 = vpop.f32.mrb[0].mxu0
      %v935 = vadd.f32 %v733, %v934
      %v936 = vpop.f32.mrb[0].mxu0
      %v937 = vadd.f32 %v737, %v936
      %v938 = vpop.f32.mrb[0].mxu0
      %v939 = vadd.f32 %v733, %v938
      %v940 = vpop.f32.mrb[0].mxu0
      %v941 = vadd.f32 %v737, %v940
      %942 = vdwg.mxu0
      %v943 = vmax.f32 %v935, 0.0
      %v944 = vmax.f32 %v937, 0.0
      %v945 = vmax.f32 %v939, 0.0
      %v946 = vmax.f32 %v941, 0.0
      %s947 = scalar_lea.vmem %s2, 2
      %v948 = vld [vmem:[%s947] ss:$4 sm:$0x3]
      %v950 = vlaneseq
      %v951 = vshrl.u32 %v950, 7
      %v952 = vsub.s32 0, %v951
      %v953 = vrot.slane %v948, %v952
      %v954 = vlaneseq
      %v955 = vshrl.u32 %v954, 7
      %v956 = vsub.s32 1, %v955
      %v957 = vrot.slane %v948, %v956
      %v960 = vmul.f32 %v943, %v953
      %v961 = vmul.f32 %v944, %v957
      %v962 = vmul.f32 %v945, %v953
      %v963 = vmul.f32 %v946, %v957
      %s964 = scalar_lea.vmem %s2, 3
      %v965 = vld [vmem:[%s964] ss:$4 sm:$0x3]
      %v967 = vlaneseq
      %v968 = vshrl.u32 %v967, 7
      %v969 = vsub.s32 0, %v968
      %v970 = vrot.slane %v965, %v969
      %v971 = vlaneseq
      %v972 = vshrl.u32 %v971, 7
      %v973 = vsub.s32 1, %v972
      %v974 = vrot.slane %v965, %v973
      %v977 = vadd.f32 %v960, %v970
      %v978 = vadd.f32 %v961, %v974
      %v979 = vadd.f32 %v962, %v970
      %v980 = vadd.f32 %v963, %v974
      %v981 = vmax.f32 %v977, 0.0
      %v982 = vmax.f32 %v978, 0.0
      %v983 = vmax.f32 %v979, 0.0
      %v984 = vmax.f32 %v980, 0.0
      %v989 = vrot.slane %v981, 7
      %v990 = vrot.slane %v982, 7
      %v991 = vrot.slane %v983, 7
      %v992 = vsel %vm296, %v989, %v991
      %v993 = vrot.slane %v984, 7
      %v994 = vsel %vm296, %v990, %v993
      %1001 = vst [vmem:[#allocation2] sm:$0xfe] %v989
      %1002 = vst [vmem:[#allocation2 + $0x8] sm:$0xfe] %v990
      %1003 = vst [vmem:[#allocation2 + $0x10] sm:$0xff] %v992
      %1004 = vst [vmem:[#allocation2 + $0x18] sm:$0xff] %v994
      %1005 = vst [vmem:[#allocation2 + $0x20] sm:$0x1] %v991
      %1006 = vst [vmem:[#allocation2 + $0x28] sm:$0x1] %v993
      %v1007 = vld [vmem:[#allocation2] sm:$0xff]
      %v1008 = vld [vmem:[#allocation2 + $0x8] sm:$0xff]
      %v1009 = vld [vmem:[#allocation2 + $0x10] sm:$0xff]
      %v1010 = vld [vmem:[#allocation2 + $0x18] sm:$0xff]
      %1011 = vrot.lane.b32.xlu0 %v1007, 16
      %v1012 = vpop.permute.xlu0 %1011
      %1013 = vrot.lane.b32.xlu0 %v1009, 16
      %v1014 = vpop.permute.xlu0 %1013
      %1015 = vrot.lane.b32.xlu0 %v1008, 16
      %v1016 = vpop.permute.xlu0 %1015
      %1017 = vrot.lane.b32.xlu0 %v1010, 16
      %v1018 = vpop.permute.xlu0 %1017
      %v1019 = vsel %vm329, %v1012, %v1016
      %v1020 = vsel %vm329, %v1014, %v1018
      %v1021 = vsel %vm329, %v1016, %v1012
      %v1022 = vsel %vm329, %v1018, %v1014
      %1023 = vrot.lane.b32.xlu0 %v1007, 112
      %v1024 = vpop.permute.xlu0 %1023
      %1025 = vrot.lane.b32.xlu0 %v1009, 112
      %v1026 = vpop.permute.xlu0 %1025
      %1027 = vrot.lane.b32.xlu0 %v1008, 112
      %v1028 = vpop.permute.xlu0 %1027
      %1029 = vrot.lane.b32.xlu0 %v1010, 112
      %v1030 = vpop.permute.xlu0 %1029
      %v1031 = vsel %vm342, %v1024, %v1028
      %v1032 = vsel %vm342, %v1026, %v1030
      %v1033 = vsel %vm342, %v1028, %v1024
      %v1034 = vsel %vm342, %v1030, %v1026
      %v1035 = vld [vmem:[%s4] ss:$8 sm:$0x3]
      %v1037 = vlaneseq
      %v1038 = vshrl.u32 %v1037, 7
      %v1039 = vsub.s32 0, %v1038
      %v1040 = vrot.slane %v1035, %v1039
      %v1041 = vlaneseq
      %v1042 = vshrl.u32 %v1041, 7
      %v1043 = vsub.s32 1, %v1042
      %v1044 = vrot.slane %v1035, %v1043
      %v1047 = vmul.f32 %v1021, %v1040
      %v1048 = vmul.f32 %v1019, %v1044
      %v1049 = vmul.f32 %v1022, %v1040
      %v1050 = vmul.f32 %v1020, %v1044
      %s1051 = scalar_lea.vmem %s4, 1
      %v1052 = vld [vmem:[%s1051] ss:$8 sm:$0x3]
      %v1054 = vlaneseq
      %v1055 = vshrl.u32 %v1054, 7
      %v1056 = vsub.s32 0, %v1055
      %v1057 = vrot.slane %v1052, %v1056
      %v1058 = vlaneseq
      %v1059 = vshrl.u32 %v1058, 7
      %v1060 = vsub.s32 1, %v1059
      %v1061 = vrot.slane %v1052, %v1060
      %v1064 = vmul.f32 %v1007, %v1057
      %v1065 = vmul.f32 %v1008, %v1061
      %v1066 = vmul.f32 %v1009, %v1057
      %v1067 = vmul.f32 %v1010, %v1061
      %v1068 = vadd.f32 %v1047, %v1064
      %v1069 = vadd.f32 %v1048, %v1065
      %v1070 = vadd.f32 %v1049, %v1066
      %v1071 = vadd.f32 %v1050, %v1067
      %s1072 = scalar_lea.vmem %s4, 2
      %v1073 = vld [vmem:[%s1072] ss:$8 sm:$0x3]
      %v1075 = vlaneseq
      %v1076 = vshrl.u32 %v1075, 7
      %v1077 = vsub.s32 0, %v1076
      %v1078 = vrot.slane %v1073, %v1077
      %v1079 = vlaneseq
      %v1080 = vshrl.u32 %v1079, 7
      %v1081 = vsub.s32 1, %v1080
      %v1082 = vrot.slane %v1073, %v1081
      %v1085 = vmul.f32 %v1031, %v1078
      %v1086 = vmul.f32 %v1033, %v1082
      %v1087 = vmul.f32 %v1032, %v1078
      %v1088 = vmul.f32 %v1034, %v1082
      %v1089 = vadd.f32 %v1068, %v1085
      %v1090 = vadd.f32 %v1069, %v1086
      %v1091 = vadd.f32 %v1070, %v1087
      %v1092 = vadd.f32 %v1071, %v1088
      %v1093 = vld [vmem:[#allocation2] sm:$0xfe]
      %v1094 = vld [vmem:[#allocation2 + $0x8] sm:$0xfe]
      %v1095 = vld [vmem:[#allocation2 + $0x20] sm:$0x1]
      %v1096 = vld [vmem:[#allocation2 + $0x28] sm:$0x1]
      %v1103 = vrot.slane %v1093, 1
      %v1104 = vrot.slane %v1009, 1
      %v1105 = vsel %vm417, %v1103, %v1104
      %v1106 = vrot.slane %v1094, 1
      %v1107 = vrot.slane %v1010, 1
      %v1108 = vsel %vm417, %v1106, %v1107
      %v1109 = vrot.slane %v1095, 1
      %v1110 = vsel %vm417, %v1104, %v1109
      %v1111 = vrot.slane %v1096, 1
      %v1112 = vsel %vm417, %v1107, %v1111
      %1117 = vrot.lane.b32.xlu0 %v1105, 16
      %v1118 = vpop.permute.xlu0 %1117
      %1119 = vrot.lane.b32.xlu0 %v1110, 16
      %v1120 = vpop.permute.xlu0 %1119
      %1121 = vrot.lane.b32.xlu0 %v1108, 16
      %v1122 = vpop.permute.xlu0 %1121
      %1123 = vrot.lane.b32.xlu0 %v1112, 16
      %v1124 = vpop.permute.xlu0 %1123
      %v1125 = vsel %vm329, %v1118, %v1122
      %v1126 = vsel %vm329, %v1120, %v1124
      %v1127 = vsel %vm329, %v1122, %v1118
      %v1128 = vsel %vm329, %v1124, %v1120
      %1129 = vrot.lane.b32.xlu0 %v1105, 112
      %v1130 = vpop.permute.xlu0 %1129
      %1131 = vrot.lane.b32.xlu0 %v1110, 112
      %v1132 = vpop.permute.xlu0 %1131
      %1133 = vrot.lane.b32.xlu0 %v1108, 112
      %v1134 = vpop.permute.xlu0 %1133
      %1135 = vrot.lane.b32.xlu0 %v1112, 112
      %v1136 = vpop.permute.xlu0 %1135
      %v1137 = vsel %vm342, %v1130, %v1134
      %v1138 = vsel %vm342, %v1132, %v1136
      %v1139 = vsel %vm342, %v1134, %v1130
      %v1140 = vsel %vm342, %v1136, %v1132
      %s1141 = scalar_lea.vmem %s4, 3
      %v1142 = vld [vmem:[%s1141] ss:$8 sm:$0x3]
      %v1144 = vlaneseq
      %v1145 = vshrl.u32 %v1144, 7
      %v1146 = vsub.s32 0, %v1145
      %v1147 = vrot.slane %v1142, %v1146
      %v1148 = vlaneseq
      %v1149 = vshrl.u32 %v1148, 7
      %v1150 = vsub.s32 1, %v1149
      %v1151 = vrot.slane %v1142, %v1150
      %v1154 = vmul.f32 %v1127, %v1147
      %v1155 = vmul.f32 %v1125, %v1151
      %v1156 = vmul.f32 %v1128, %v1147
      %v1157 = vmul.f32 %v1126, %v1151
      %s1158 = scalar_lea.vmem %s4, 4
      %v1159 = vld [vmem:[%s1158] ss:$8 sm:$0x3]
      %v1161 = vlaneseq
      %v1162 = vshrl.u32 %v1161, 7
      %v1163 = vsub.s32 0, %v1162
      %v1164 = vrot.slane %v1159, %v1163
      %v1165 = vlaneseq
      %v1166 = vshrl.u32 %v1165, 7
      %v1167 = vsub.s32 1, %v1166
      %v1168 = vrot.slane %v1159, %v1167
      %v1171 = vmul.f32 %v1093, %v1164
      %v1172 = vmul.f32 %v1094, %v1168
      %v1173 = vmul.f32 %v1009, %v1164
      %v1174 = vmul.f32 %v1010, %v1168
      %v1175 = vmul.f32 %v1095, %v1164
      %v1176 = vmul.f32 %v1096, %v1168
      %v1183 = vrot.slane %v1171, 1
      %v1184 = vrot.slane %v1173, 1
      %v1185 = vsel %vm417, %v1183, %v1184
      %v1186 = vrot.slane %v1172, 1
      %v1187 = vrot.slane %v1174, 1
      %v1188 = vsel %vm417, %v1186, %v1187
      %v1189 = vrot.slane %v1175, 1
      %v1190 = vsel %vm417, %v1184, %v1189
      %v1191 = vrot.slane %v1176, 1
      %v1192 = vsel %vm417, %v1187, %v1191
      %v1197 = vadd.f32 %v1154, %v1185
      %v1198 = vadd.f32 %v1155, %v1188
      %v1199 = vadd.f32 %v1156, %v1190
      %v1200 = vadd.f32 %v1157, %v1192
      %s1201 = scalar_lea.vmem %s4, 5
      %v1202 = vld [vmem:[%s1201] ss:$8 sm:$0x3]
      %v1204 = vlaneseq
      %v1205 = vshrl.u32 %v1204, 7
      %v1206 = vsub.s32 0, %v1205
      %v1207 = vrot.slane %v1202, %v1206
      %v1208 = vlaneseq
      %v1209 = vshrl.u32 %v1208, 7
      %v1210 = vsub.s32 1, %v1209
      %v1211 = vrot.slane %v1202, %v1210
      %v1214 = vmul.f32 %v1137, %v1207
      %v1215 = vmul.f32 %v1139, %v1211
      %v1216 = vmul.f32 %v1138, %v1207
      %v1217 = vmul.f32 %v1140, %v1211
      %v1218 = vadd.f32 %v1197, %v1214
      %v1219 = vadd.f32 %v1198, %v1215
      %v1220 = vadd.f32 %v1199, %v1216
      %v1221 = vadd.f32 %v1200, %v1217
      %v1222 = vadd.f32 %v1089, %v1218
      %v1223 = vadd.f32 %v1090, %v1219
      %v1224 = vadd.f32 %v1091, %v1220
      %v1225 = vadd.f32 %v1092, %v1221
      %v1226 = vld [vmem:[#allocation2] sm:$0xfc]
      %v1227 = vld [vmem:[#allocation2 + $0x8] sm:$0xfc]
      %v1228 = vld [vmem:[#allocation2 + $0x20] sm:$0x3]
      %v1229 = vld [vmem:[#allocation2 + $0x28] sm:$0x3]
      %v1234 = vrot.slane %v1226, 2
      %v1235 = vrot.slane %v1009, 2
      %v1236 = vsel %vm549, %v1234, %v1235
      %v1237 = vrot.slane %v1227, 2
      %v1238 = vrot.slane %v1010, 2
      %v1239 = vsel %vm549, %v1237, %v1238
      %v1240 = vrot.slane %v1228, 2
      %v1241 = vsel %vm549, %v1235, %v1240
      %v1242 = vrot.slane %v1229, 2
      %v1243 = vsel %vm549, %v1238, %v1242
      %1248 = vrot.lane.b32.xlu0 %v1236, 16
      %v1249 = vpop.permute.xlu0 %1248
      %1250 = vrot.lane.b32.xlu0 %v1241, 16
      %v1251 = vpop.permute.xlu0 %1250
      %1252 = vrot.lane.b32.xlu0 %v1239, 16
      %v1253 = vpop.permute.xlu0 %1252
      %1254 = vrot.lane.b32.xlu0 %v1243, 16
      %v1255 = vpop.permute.xlu0 %1254
      %v1256 = vsel %vm329, %v1249, %v1253
      %v1257 = vsel %vm329, %v1251, %v1255
      %v1258 = vsel %vm329, %v1253, %v1249
      %v1259 = vsel %vm329, %v1255, %v1251
      %1260 = vrot.lane.b32.xlu0 %v1236, 112
      %v1261 = vpop.permute.xlu0 %1260
      %1262 = vrot.lane.b32.xlu0 %v1241, 112
      %v1263 = vpop.permute.xlu0 %1262
      %1264 = vrot.lane.b32.xlu0 %v1239, 112
      %v1265 = vpop.permute.xlu0 %1264
      %1266 = vrot.lane.b32.xlu0 %v1243, 112
      %v1267 = vpop.permute.xlu0 %1266
      %v1268 = vsel %vm342, %v1261, %v1265
      %v1269 = vsel %vm342, %v1263, %v1267
      %v1270 = vsel %vm342, %v1265, %v1261
      %v1271 = vsel %vm342, %v1267, %v1263
      %s1272 = scalar_lea.vmem %s4, 6
      %v1273 = vld [vmem:[%s1272] ss:$8 sm:$0x3]
      %v1275 = vlaneseq
      %v1276 = vshrl.u32 %v1275, 7
      %v1277 = vsub.s32 0, %v1276
      %v1278 = vrot.slane %v1273, %v1277
      %v1279 = vlaneseq
      %v1280 = vshrl.u32 %v1279, 7
      %v1281 = vsub.s32 1, %v1280
      %v1282 = vrot.slane %v1273, %v1281
      %v1285 = vmul.f32 %v1258, %v1278
      %v1286 = vmul.f32 %v1256, %v1282
      %v1287 = vmul.f32 %v1259, %v1278
      %v1288 = vmul.f32 %v1257, %v1282
      %s1289 = scalar_lea.vmem %s4, 7
      %v1290 = vld [vmem:[%s1289] ss:$8 sm:$0x3]
      %v1292 = vlaneseq
      %v1293 = vshrl.u32 %v1292, 7
      %v1294 = vsub.s32 0, %v1293
      %v1295 = vrot.slane %v1290, %v1294
      %v1296 = vlaneseq
      %v1297 = vshrl.u32 %v1296, 7
      %v1298 = vsub.s32 1, %v1297
      %v1299 = vrot.slane %v1290, %v1298
      %v1302 = vmul.f32 %v1226, %v1295
      %v1303 = vmul.f32 %v1227, %v1299
      %v1304 = vmul.f32 %v1009, %v1295
      %v1305 = vmul.f32 %v1010, %v1299
      %v1306 = vmul.f32 %v1228, %v1295
      %v1307 = vmul.f32 %v1229, %v1299
      %v1314 = vrot.slane %v1302, 2
      %v1315 = vrot.slane %v1304, 2
      %v1316 = vsel %vm549, %v1314, %v1315
      %v1317 = vrot.slane %v1303, 2
      %v1318 = vrot.slane %v1305, 2
      %v1319 = vsel %vm549, %v1317, %v1318
      %v1320 = vrot.slane %v1306, 2
      %v1321 = vsel %vm549, %v1315, %v1320
      %v1322 = vrot.slane %v1307, 2
      %v1323 = vsel %vm549, %v1318, %v1322
      %v1328 = vadd.f32 %v1285, %v1316
      %v1329 = vadd.f32 %v1286, %v1319
      %v1330 = vadd.f32 %v1287, %v1321
      %v1331 = vadd.f32 %v1288, %v1323
      %s1332 = scalar_lea.vmem %s4, 16
      %v1333 = vld [vmem:[%s1332] ss:$8 sm:$0x3]
      %v1335 = vlaneseq
      %v1336 = vshrl.u32 %v1335, 7
      %v1337 = vsub.s32 0, %v1336
      %v1338 = vrot.slane %v1333, %v1337
      %v1339 = vlaneseq
      %v1340 = vshrl.u32 %v1339, 7
      %v1341 = vsub.s32 1, %v1340
      %v1342 = vrot.slane %v1333, %v1341
      %v1345 = vmul.f32 %v1268, %v1338
      %v1346 = vmul.f32 %v1270, %v1342
      %v1347 = vmul.f32 %v1269, %v1338
      %v1348 = vmul.f32 %v1271, %v1342
      %v1349 = vadd.f32 %v1328, %v1345
      %v1350 = vadd.f32 %v1329, %v1346
      %v1351 = vadd.f32 %v1330, %v1347
      %v1352 = vadd.f32 %v1331, %v1348
      %v1353 = vadd.f32 %v1222, %v1349
      %v1354 = vadd.f32 %v1223, %v1350
      %v1355 = vadd.f32 %v1224, %v1351
      %v1356 = vadd.f32 %v1225, %v1352
      %v1357 = vld [vmem:[%s5] ss:$4 sm:$0x3]
      %v1359 = vlaneseq
      %v1360 = vshrl.u32 %v1359, 7
      %v1361 = vsub.s32 0, %v1360
      %v1362 = vrot.slane %v1357, %v1361
      %v1363 = vlaneseq
      %v1364 = vshrl.u32 %v1363, 7
      %v1365 = vsub.s32 1, %v1364
      %v1366 = vrot.slane %v1357, %v1365
      %v1369 = vadd.f32 %v1353, %v1362
      %v1370 = vadd.f32 %v1354, %v1366
      %v1371 = vadd.f32 %v1355, %v1362
      %v1372 = vadd.f32 %v1356, %v1366
      %v1373 = vmax.f32 %v1369, 0.0
      %v1374 = vmax.f32 %v1370, 0.0
      %v1375 = vmax.f32 %v1371, 0.0
      %v1376 = vmax.f32 %v1372, 0.0
      %v1377 = vpack.c.bf16 %v1375, %v1373
      %v1378 = vpack.c.bf16 %v1376, %v1374
      %v1379 = vld [vmem:[%s6] sm:$0xff]
      %v1380 = vld [vmem:[%s6 + $0x8] sm:$0xff]
      %v1381 = vld [vmem:[%s6 + $0x10] sm:$0xff]
      %v1382 = vld [vmem:[%s6 + $0x18] sm:$0xff]
      %v1383 = vld [vmem:[%s6 + $0x20] sm:$0xff]
      %v1384 = vld [vmem:[%s6 + $0x28] sm:$0xff]
      %v1385 = vld [vmem:[%s6 + $0x30] sm:$0xff]
      %v1386 = vld [vmem:[%s6 + $0x38] sm:$0xff]
      %v1387 = vld [vmem:[%s6 + $0x40] sm:$0xff]
      %v1388 = vld [vmem:[%s6 + $0x48] sm:$0xff]
      %v1389 = vld [vmem:[%s6 + $0x50] sm:$0xff]
      %v1390 = vld [vmem:[%s6 + $0x58] sm:$0xff]
      %v1391 = vld [vmem:[%s6 + $0x60] sm:$0xff]
      %v1392 = vld [vmem:[%s6 + $0x68] sm:$0xff]
      %v1393 = vld [vmem:[%s6 + $0x70] sm:$0xff]
      %v1394 = vld [vmem:[%s6 + $0x78] sm:$0xff]
      %v1395 = vld [vmem:[%s6 + $0x80] sm:$0xff]
      %v1396 = vld [vmem:[%s6 + $0x88] sm:$0xff]
      %v1397 = vld [vmem:[%s6 + $0x90] sm:$0xff]
      %v1398 = vld [vmem:[%s6 + $0x98] sm:$0xff]
      %v1399 = vld [vmem:[%s6 + $0xa0] sm:$0xff]
      %v1400 = vld [vmem:[%s6 + $0xa8] sm:$0xff]
      %v1401 = vld [vmem:[%s6 + $0xb0] sm:$0xff]
      %v1402 = vld [vmem:[%s6 + $0xb8] sm:$0xff]
      %v1403 = vld [vmem:[%s6 + $0xc0] sm:$0xff]
      %v1404 = vld [vmem:[%s6 + $0xc8] sm:$0xff]
      %v1405 = vld [vmem:[%s6 + $0xd0] sm:$0xff]
      %v1406 = vld [vmem:[%s6 + $0xd8] sm:$0xff]
      %v1407 = vld [vmem:[%s6 + $0xe0] sm:$0xff]
      %v1408 = vld [vmem:[%s6 + $0xe8] sm:$0xff]
      %v1409 = vld [vmem:[%s6 + $0xf0] sm:$0xff]
      %v1410 = vld [vmem:[%s6 + $0xf8] sm:$0xff]
      %s1411 = scalar_lea.vmem %s5, 1
      %v1412 = vld [vmem:[%s1411] ss:$4 sm:$0x3]
      %v1414 = vlaneseq
      %v1415 = vshrl.u32 %v1414, 7
      %v1416 = vsub.s32 0, %v1415
      %v1417 = vrot.slane %v1412, %v1416
      %v1418 = vlaneseq
      %v1419 = vshrl.u32 %v1418, 7
      %v1420 = vsub.s32 1, %v1419
      %v1421 = vrot.slane %v1412, %v1420
      %v1456 = vunpack.c.l.b16 %v1379
      %v1457 = vunpack.c.h.b16 %v1379
      %v1458 = vunpack.c.l.b16 %v1380
      %v1459 = vunpack.c.h.b16 %v1380
      %v1460 = vunpack.c.l.b16 %v1381
      %v1461 = vunpack.c.h.b16 %v1381
      %v1462 = vunpack.c.l.b16 %v1382
      %v1463 = vunpack.c.h.b16 %v1382
      %v1464 = vunpack.c.l.b16 %v1383
      %v1465 = vunpack.c.h.b16 %v1383
      %v1466 = vunpack.c.l.b16 %v1384
      %v1467 = vunpack.c.h.b16 %v1384
      %v1468 = vunpack.c.l.b16 %v1385
      %v1469 = vunpack.c.h.b16 %v1385
      %v1470 = vunpack.c.l.b16 %v1386
      %v1471 = vunpack.c.h.b16 %v1386
      %v1472 = vunpack.c.l.b16 %v1387
      %v1473 = vunpack.c.h.b16 %v1387
      %v1474 = vunpack.c.l.b16 %v1388
      %v1475 = vunpack.c.h.b16 %v1388
      %v1476 = vunpack.c.l.b16 %v1389
      %v1477 = vunpack.c.h.b16 %v1389
      %v1478 = vunpack.c.l.b16 %v1390
      %v1479 = vunpack.c.h.b16 %v1390
      %v1480 = vunpack.c.l.b16 %v1391
      %v1481 = vunpack.c.h.b16 %v1391
      %v1482 = vunpack.c.l.b16 %v1392
      %v1483 = vunpack.c.h.b16 %v1392
      %v1484 = vunpack.c.l.b16 %v1393
      %v1485 = vunpack.c.h.b16 %v1393
      %v1486 = vunpack.c.l.b16 %v1394
      %v1487 = vunpack.c.h.b16 %v1394
      %v1488 = vunpack.c.l.b16 %v1395
      %v1489 = vunpack.c.h.b16 %v1395
      %v1490 = vunpack.c.l.b16 %v1396
      %v1491 = vunpack.c.h.b16 %v1396
      %v1492 = vunpack.c.l.b16 %v1397
      %v1493 = vunpack.c.h.b16 %v1397
      %v1494 = vunpack.c.l.b16 %v1398
      %v1495 = vunpack.c.h.b16 %v1398
      %v1496 = vunpack.c.l.b16 %v1399
      %v1497 = vunpack.c.h.b16 %v1399
      %v1498 = vunpack.c.l.b16 %v1400
      %v1499 = vunpack.c.h.b16 %v1400
      %v1500 = vunpack.c.l.b16 %v1401
      %v1501 = vunpack.c.h.b16 %v1401
      %v1502 = vunpack.c.l.b16 %v1402
      %v1503 = vunpack.c.h.b16 %v1402
      %v1504 = vunpack.c.l.b16 %v1403
      %v1505 = vunpack.c.h.b16 %v1403
      %v1506 = vunpack.c.l.b16 %v1404
      %v1507 = vunpack.c.h.b16 %v1404
      %v1508 = vunpack.c.l.b16 %v1405
      %v1509 = vunpack.c.h.b16 %v1405
      %v1510 = vunpack.c.l.b16 %v1406
      %v1511 = vunpack.c.h.b16 %v1406
      %v1512 = vunpack.c.l.b16 %v1407
      %v1513 = vunpack.c.h.b16 %v1407
      %v1514 = vunpack.c.l.b16 %v1408
      %v1515 = vunpack.c.h.b16 %v1408
      %v1516 = vunpack.c.l.b16 %v1409
      %v1517 = vunpack.c.h.b16 %v1409
      %v1518 = vunpack.c.l.b16 %v1410
      %v1519 = vunpack.c.h.b16 %v1410
      %v1520 = vpack.c.b16 %v1458, %v1456
      %v1521 = vpack.c.b16 %v1459, %v1457
      %v1522 = vpack.c.b16 %v1462, %v1460
      %v1523 = vpack.c.b16 %v1463, %v1461
      %v1524 = vpack.c.b16 %v1466, %v1464
      %v1525 = vpack.c.b16 %v1467, %v1465
      %v1526 = vpack.c.b16 %v1470, %v1468
      %v1527 = vpack.c.b16 %v1471, %v1469
      %v1528 = vpack.c.b16 %v1474, %v1472
      %v1529 = vpack.c.b16 %v1475, %v1473
      %v1530 = vpack.c.b16 %v1478, %v1476
      %v1531 = vpack.c.b16 %v1479, %v1477
      %v1532 = vpack.c.b16 %v1482, %v1480
      %v1533 = vpack.c.b16 %v1483, %v1481
      %v1534 = vpack.c.b16 %v1486, %v1484
      %v1535 = vpack.c.b16 %v1487, %v1485
      %v1536 = vpack.c.b16 %v1490, %v1488
      %v1537 = vpack.c.b16 %v1491, %v1489
      %v1538 = vpack.c.b16 %v1494, %v1492
      %v1539 = vpack.c.b16 %v1495, %v1493
      %v1540 = vpack.c.b16 %v1498, %v1496
      %v1541 = vpack.c.b16 %v1499, %v1497
      %v1542 = vpack.c.b16 %v1502, %v1500
      %v1543 = vpack.c.b16 %v1503, %v1501
      %v1544 = vpack.c.b16 %v1506, %v1504
      %v1545 = vpack.c.b16 %v1507, %v1505
      %v1546 = vpack.c.b16 %v1510, %v1508
      %v1547 = vpack.c.b16 %v1511, %v1509
      %v1548 = vpack.c.b16 %v1514, %v1512
      %v1549 = vpack.c.b16 %v1515, %v1513
      %v1550 = vpack.c.b16 %v1518, %v1516
      %v1551 = vpack.c.b16 %v1519, %v1517
      %1584 = vmatprep.subr.bf16.mxu0 %v1521
      %1585 = vmatpush1.bf16.msra.mxu0 %v1520
      %1586 = vmatprep.subr.bf16.mxu0 %v1523
      %1587 = vmatpush1.bf16.msra.mxu0 %v1522
      %1588 = vmatprep.subr.bf16.mxu0 %v1525
      %1589 = vmatpush1.bf16.msra.mxu0 %v1524
      %1590 = vmatprep.subr.bf16.mxu0 %v1527
      %1591 = vmatpush1.bf16.msra.mxu0 %v1526
      %1592 = vmatprep.subr.bf16.mxu0 %v1529
      %1593 = vmatpush1.bf16.msra.mxu0 %v1528
      %1594 = vmatprep.subr.bf16.mxu0 %v1531
      %1595 = vmatpush1.bf16.msra.mxu0 %v1530
      %1596 = vmatprep.subr.bf16.mxu0 %v1533
      %1597 = vmatpush1.bf16.msra.mxu0 %v1532
      %1598 = vmatprep.subr.bf16.mxu0 %v1535
      %1599 = vmatpush1.bf16.msra.mxu0 %v1534
      %1600 = vmatprep.subr.bf16.mxu0 %v1537
      %1601 = vmatpush1.bf16.msra.mxu0 %v1536
      %1602 = vmatprep.subr.bf16.mxu0 %v1539
      %1603 = vmatpush1.bf16.msra.mxu0 %v1538
      %1604 = vmatprep.subr.bf16.mxu0 %v1541
      %1605 = vmatpush1.bf16.msra.mxu0 %v1540
      %1606 = vmatprep.subr.bf16.mxu0 %v1543
      %1607 = vmatpush1.bf16.msra.mxu0 %v1542
      %1608 = vmatprep.subr.bf16.mxu0 %v1545
      %1609 = vmatpush1.bf16.msra.mxu0 %v1544
      %1610 = vmatprep.subr.bf16.mxu0 %v1547
      %1611 = vmatpush1.bf16.msra.mxu0 %v1546
      %1612 = vmatprep.subr.bf16.mxu0 %v1549
      %1613 = vmatpush1.bf16.msra.mxu0 %v1548
      %1614 = vmatprep.subr.bf16.mxu0 %v1551
      %1615 = vmatpush1.bf16.msra.mxu0 %v1550
      %1616 = vmatprep.mubr.bf16.mxu0 %v1378
      %1617 = vmatmul.mubr.bf16.gmra.mrb[0].mxu0 %v1377
      %v1618 = vpop.f32.mrb[0].mxu0
      %v1619 = vadd.f32 %v1417, %v1618
      %v1620 = vpop.f32.mrb[0].mxu0
      %v1621 = vadd.f32 %v1421, %v1620
      %v1622 = vpop.f32.mrb[0].mxu0
      %v1623 = vadd.f32 %v1417, %v1622
      %v1624 = vpop.f32.mrb[0].mxu0
      %v1625 = vadd.f32 %v1421, %v1624
      %1626 = vdwg.mxu0
      %v1627 = vmax.f32 %v1619, 0.0
      %v1628 = vmax.f32 %v1621, 0.0
      %v1629 = vmax.f32 %v1623, 0.0
      %v1630 = vmax.f32 %v1625, 0.0
      %s1631 = scalar_lea.vmem %s5, 2
      %v1632 = vld [vmem:[%s1631] ss:$4 sm:$0x3]
      %v1634 = vlaneseq
      %v1635 = vshrl.u32 %v1634, 7
      %v1636 = vsub.s32 0, %v1635
      %v1637 = vrot.slane %v1632, %v1636
      %v1638 = vlaneseq
      %v1639 = vshrl.u32 %v1638, 7
      %v1640 = vsub.s32 1, %v1639
      %v1641 = vrot.slane %v1632, %v1640
      %v1644 = vmul.f32 %v1627, %v1637
      %v1645 = vmul.f32 %v1628, %v1641
      %v1646 = vmul.f32 %v1629, %v1637
      %v1647 = vmul.f32 %v1630, %v1641
      %s1648 = scalar_lea.vmem %s5, 3
      %v1649 = vld [vmem:[%s1648] ss:$4 sm:$0x3]
      %v1651 = vlaneseq
      %v1652 = vshrl.u32 %v1651, 7
      %v1653 = vsub.s32 0, %v1652
      %v1654 = vrot.slane %v1649, %v1653
      %v1655 = vlaneseq
      %v1656 = vshrl.u32 %v1655, 7
      %v1657 = vsub.s32 1, %v1656
      %v1658 = vrot.slane %v1649, %v1657
      %v1661 = vadd.f32 %v1644, %v1654
      %v1662 = vadd.f32 %v1645, %v1658
      %v1663 = vadd.f32 %v1646, %v1654
      %v1664 = vadd.f32 %v1647, %v1658
      %v1665 = vadd.f32 %v1661, %v288
      %v1666 = vadd.f32 %v1662, %v289
      %v1667 = vadd.f32 %v1663, %v290
      %v1668 = vadd.f32 %v1664, %v291
      %v1669 = vmax.f32 %v1665, 0.0
      %v1670 = vmax.f32 %v1666, 0.0
      %v1671 = vmax.f32 %v1667, 0.0
      %v1672 = vmax.f32 %v1668, 0.0
      %1673 = vst [vmem:[%s278] sm:$0xff] %v1669
      %1674 = vst [vmem:[%s278 + $0x8] sm:$0xff] %v1670
      %1675 = vst [vmem:[%s278 + $0x10] sm:$0xff] %v1671
      %1676 = vst [vmem:[%s278 + $0x18] sm:$0xff] %v1672
      %p1677 = scmp.lt.s32.totalorder %s18, 1
      %s1678 = scalar_select %p1677, %s18, 1
      %s1679 = smul.addr %s1678, 4
      %s1680 = smul.addr %s1679, 8
      %s1681 = scalar_lea.vmem %s7, %s1680
      // Predicated region
      $region49: #{resblock_forward.1} parent=47 // pred_check
        %p1682 = pneg %p188
      $region50: #{resblock_forward.1} parent=47 // pred_check_branch
        %1684 = sbr.rel (%p1682) target = $region52
      $region51: #{resblock_forward.1} parent=47 // pred_region
        _
      $region52: #{resblock_forward.1} parent=47 // pred_fallthru
        _
    $region48: #{resblock_forward.1} parent=5 // pred_fallthru
      _
    %p1685 = scmp.le.s32.totalorder 2, %s13
    // Predicated region
    $region53: #{resblock_forward.1} parent=5 // pred_check
      %p1686 = pneg %p1685
    $region54: #{resblock_forward.1} parent=5 // pred_check_branch
      %1688 = sbr.rel (%p1686) target = $region56
    $region55: #{resblock_forward.1} parent=5 // pred_region
      %s1689 = ssub.s32 %s13, 2
      // Predicated region
      $region57: #{resblock_forward.1} parent=55 // pred_check
        %p1690 = pneg %p194
      $region58: #{resblock_forward.1} parent=55 // pred_check_branch
        %1692 = sbr.rel (%p1690) target = $region60
      $region59: #{resblock_forward.1} parent=55 // pred_region
        %p1693 = scmp.lt.s32.totalorder %s19, 1
        %s1694 = scalar_select %p1693, %s19, 1
        %s1695 = smul.addr %s1694, 4
        %s1696 = smul.addr %s1695, 8
        %s1697 = scalar_lea.vmem %s7, %s1696
      $region60: #{resblock_forward.1} parent=55 // pred_fallthru
        _
    $region56: #{resblock_forward.1} parent=5 // pred_fallthru
      _
  $region6: #{resblock_forward.1} parent=0 // loop_footer
    %s17 = sadd.s32 1, %s13
  $region7: #{resblock_forward.1} parent=0 // loop_footer_branch
    %12 = sbr.rel target = $region3
  $region8: #{resblock_forward.1} parent=0 // loop_exit
    _

</llo_original>
